<compile_context>
chip_gen: v6e
topology: v6e:2x2x1
jax: 0.10.0
libtpu: 0.0.40
codegen_flags: <defaults>
</compile_context>

<pallas_src>
import functools

import jax
import jax.numpy as jnp
from jax.experimental import pallas as pl
from jax.experimental.pallas import tpu as pltpu

FEAT_DIM = 512
NUM_CLASSES = 10
PADDED_CLASSES = 128   # lane-dense head output; valid logits are [:NUM_CLASSES]


def _round_up(x, m):
    return (x + m - 1) // m * m


def _shared_mtl_kernel(x_ref, wf_ref, bf_ref, wh_ref, bh_ref, out_ref):
    """Fused backbone (GAP+Linear folded into one matmul, ReLU) + task head.

    x_ref  : (TB, C*H*W)   x dtype (f32 or bf16), lane-dense 2D batch tile
    wf_ref : (C*H*W, 512)  fused backbone weight (w_feat / (H*W), repeated)
    bf_ref : (1, 512)      f32
    wh_ref : (512, 128)    task head, transposed & zero-padded to 128 lanes
    bh_ref : (1, 128)      f32
    out_ref: (TB, 128)     logits (valid columns [:10]); f32 or bf16
    """
    feat = jnp.dot(x_ref[...], wf_ref[...], preferred_element_type=jnp.float32)
    feat = jnp.maximum(feat + bf_ref[...], 0.0)                       # (TB, 512) f32
    logits = jnp.dot(feat.astype(wh_ref.dtype), wh_ref[...],
                     preferred_element_type=jnp.float32) + bh_ref[...]
    out_ref[...] = logits.astype(out_ref.dtype)                       # (TB, 128)


def prepare_params(params, H, W, dtype=jnp.float32):
    """One-time parameter prep (outside the per-call path).

    * GAP + Linear(C, 512) fold into a single (C*H*W, 512) matmul weight
      (row c*HW + s carries w_feat[c] / HW) -- exact in real arithmetic.
    * Task heads are transposed to (512, 10) and zero-padded to 128 lanes so
      the head matmul and the output store are lane-dense (unmasked vst).
    """
    hw = H * W
    wf_rep = jnp.repeat(params["w_feat"].astype(jnp.float32) / hw, hw, axis=0)
    # TODO(synk): for very large H*W (non-CIFAR inputs) this repeated weight
    # gets big; fall back to an in-kernel spatial reduction in that regime.
    prep = {
        "w_feat_rep": wf_rep.astype(dtype),                           # (C*HW, 512)
        "b_feat": params["b_feat"].reshape(1, FEAT_DIM).astype(jnp.float32),
    }
    for t in ("t0", "t1"):
        wh = params[f"w_{t}"]                                         # (10, 512) torch (out, in)
        bh = params[f"b_{t}"]                                         # (10,)
        wh_pad = jnp.zeros((FEAT_DIM, PADDED_CLASSES), dtype)
        wh_pad = wh_pad.at[:, :NUM_CLASSES].set(wh.T.astype(dtype))
        bh_pad = jnp.zeros((1, PADDED_CLASSES), jnp.float32)
        bh_pad = bh_pad.at[0, :NUM_CLASSES].set(bh.astype(jnp.float32))
        prep[f"w_{t}"] = wh_pad
        prep[f"b_{t}"] = bh_pad
    return prep


def _choose_batch_tile(B, row_vmem_bytes, align):
    """Batch tile: an `align`-multiple that divides B, budgeted so the two
    double-buffered x tiles stay near 16 MiB, with >=2 grid steps for larger
    batches so both v7x TensorCores get work."""
    budget = 16 << 20
    cap = max(align, ((budget // (2 * row_vmem_bytes)) // align) * align)
    cap = min(cap, 2048)
    if B % align != 0 or B <= align:
        # Full-batch single tile: block dim == full array dim, so no padding
        # or masking is needed (covers the tiny-batch demo case).
        # TODO(synk): very large batches not divisible by `align` would need
        # ragged-edge masking instead of a single full-batch tile.
        return B
    if B >= 2 * align:
        cap = min(cap, _round_up(pl.cdiv(B, 2), align))   # >=2 grid steps (v7x: 2 TCs)
    tb = (min(cap, B) // align) * align
    while tb > align and B % tb != 0:
        tb -= align
    return tb


@functools.partial(jax.jit, static_argnames=("task", "out_dtype"))
def shared_mtl_forward(x, prepared, task, out_dtype=jnp.bfloat16):
    """Equivalent of Shared_MTL.forward(x, task); t0_permute/t1_permute False."""
    assert task in ("t0", "t1")
    B, C, H, W = x.shape
    K = C * H * W

    # Contiguous-dim collapse only: free under jit (no extra HBM pass over x).
    # No dtype cast here -- bf16 is only used if x already arrives in bf16.
    x2 = x.reshape(B, K)

    wf = prepared["w_feat_rep"]
    bf = prepared["b_feat"]
    wh = prepared[f"w_{task}"]
    bh = prepared[f"b_{task}"]
    assert wf.shape[0] == K, "prepared params do not match x's C*H*W"

    x_bytes = x2.dtype.itemsize
    out_bytes = jnp.dtype(out_dtype).itemsize
    # Sublane granularity: 16 rows if any 2-byte dtype is in play, else 8.
    align = 16 if min(x_bytes, out_bytes) < 4 else 8
    row_vmem = _round_up(K, 128) * x_bytes          # lane-padded VMEM row footprint
    TB = _choose_batch_tile(B, row_vmem, align)
    grid = (B // TB,)

    # Explicit scoped-VMEM limit: double-buffered x/out tiles + resident weights.
    vmem_needed = (
        2 * _round_up(TB, 8) * row_vmem
        + 2 * _round_up(K, 8) * FEAT_DIM * wf.dtype.itemsize
        + 2 * FEAT_DIM * PADDED_CLASSES * wh.dtype.itemsize
        + 2 * 8 * FEAT_DIM * 4 + 2 * 8 * PADDED_CLASSES * 4
        + 2 * _round_up(TB, 8) * PADDED_CLASSES * out_bytes
    )
    vmem_limit = int(min(max(vmem_needed + (4 << 20), 24 << 20), 48 << 20))

    cost = pl.CostEstimate(
        flops=2 * B * K * FEAT_DIM + 2 * B * FEAT_DIM * PADDED_CLASSES,
        transcendentals=0,
        bytes_accessed=(B * K * x_bytes
                        + K * FEAT_DIM * wf.dtype.itemsize
                        + FEAT_DIM * PADDED_CLASSES * wh.dtype.itemsize
                        + (FEAT_DIM + PADDED_CLASSES) * 4
                        + B * PADDED_CLASSES * out_bytes),
    )

    out = pl.pallas_call(
        _shared_mtl_kernel,
        out_shape=jax.ShapeDtypeStruct((B, PADDED_CLASSES), out_dtype),
        grid=grid,
        in_specs=[
            pl.BlockSpec((TB, K), lambda i: (i, 0)),                  # batch-tiled x
            # Constant block index -> weights/biases stay resident in VMEM.
            pl.BlockSpec((K, FEAT_DIM), lambda i: (0, 0)),
            pl.BlockSpec((1, FEAT_DIM), lambda i: (0, 0)),
            pl.BlockSpec((FEAT_DIM, PADDED_CLASSES), lambda i: (0, 0)),
            pl.BlockSpec((1, PADDED_CLASSES), lambda i: (0, 0)),
        ],
        out_specs=pl.BlockSpec((TB, PADDED_CLASSES), lambda i: (i, 0)),
        compiler_params=pltpu.CompilerParams(
            dimension_semantics=("parallel",),
            vmem_limit_bytes=vmem_limit),
        cost_estimate=cost,
    )(x2, wf, bf, wh, bh)

    return out[:, :NUM_CLASSES]


def init_params(key, in_channels):
    """Deterministic synthetic parameters (shapes follow Shared_MTL.__init__)."""
    k = jax.random.split(key, 6)
    scale_f = 1.0 / jnp.sqrt(in_channels)
    scale_h = 1.0 / jnp.sqrt(FEAT_DIM)
    return {
        # synthetic backbone projection (C -> 512)
        "w_feat": scale_f * jax.random.normal(k[0], (in_channels, FEAT_DIM), jnp.float32),
        "b_feat": scale_f * jax.random.normal(k[1], (FEAT_DIM,), jnp.float32),
        # t0_head = nn.Linear(512, 10)   (PyTorch layout: (out, in))
        "w_t0": scale_h * jax.random.normal(k[2], (NUM_CLASSES, FEAT_DIM), jnp.float32),
        "b_t0": scale_h * jax.random.normal(k[3], (NUM_CLASSES,), jnp.float32),
        # t1_head = nn.Linear(512, 10)
        "w_t1": scale_h * jax.random.normal(k[4], (NUM_CLASSES, FEAT_DIM), jnp.float32),
        "b_t1": scale_h * jax.random.normal(k[5], (NUM_CLASSES,), jnp.float32),
    }


def _reference_forward(x, params, task):
    """Pure-JAX reference for correctness checking (raw PyTorch-layout params)."""
    B, C, H, W = x.shape
    pooled = jnp.mean(x.reshape(B, C, H * W), axis=-1)
    feat = jnp.maximum(pooled @ params["w_feat"] + params["b_feat"], 0.0)
    w = params["w_t0"] if task == "t0" else params["w_t1"]
    b = params["b_t0"] if task == "t0" else params["b_t1"]
    return feat @ w.T + b


if __name__ == "__main__":
    key = jax.random.PRNGKey(0)
    kx, kp = jax.random.split(key)

    B, C, H, W = 2, 4, 16, 16
    x = jax.random.normal(kx, (B, C, H, W), jnp.float32)
    params = init_params(kp, C)

    ref_t0 = _reference_forward(x, params, "t0")
    ref_t1 = _reference_forward(x, params, "t1")

    # f32 path (f32 params, f32 logits) -- checks both task heads.
    prep_f32 = prepare_params(params, H, W, jnp.float32)
    out_t0 = jax.block_until_ready(
        shared_mtl_forward(x, prep_f32, task="t0", out_dtype=jnp.float32))
    out_t1 = jax.block_until_ready(
        shared_mtl_forward(x, prep_f32, task="t1", out_dtype=jnp.float32))
    assert out_t0.shape == (B, NUM_CLASSES)
    assert out_t1.shape == (B, NUM_CLASSES)
    assert jnp.allclose(out_t0, ref_t0, atol=1e-2, rtol=1e-2)
    assert jnp.allclose(out_t1, ref_t1, atol=1e-2, rtol=1e-2)

    # Perf path: x already bf16 upstream (no wrapper astype), bf16 params,
    # bf16 logits writeback, f32 accumulation inside the kernel.
    x_bf16 = x.astype(jnp.bfloat16)   # stands in for an upstream bf16 activation
    prep_bf16 = prepare_params(params, H, W, jnp.bfloat16)
    out_bf16 = jax.block_until_ready(shared_mtl_forward(x_bf16, prep_bf16, task="t0"))
    assert out_bf16.shape == (B, NUM_CLASSES)
    assert jnp.allclose(out_bf16.astype(jnp.float32), ref_t0, atol=5e-2, rtol=5e-2)

    print("KERNEL_OK")
</pallas_src>

<mosaic_0001>
module attributes {stable_mosaic.version = 11 : i64} {
  func.func @_shared_mtl_kernel(%arg0: i32, %arg1: memref<2x1024xf32, #tpu.memory_space<vmem>>, %arg2: memref<1024x512xf32, #tpu.memory_space<vmem>>, %arg3: memref<1x512xf32, #tpu.memory_space<vmem>>, %arg4: memref<512x128xf32, #tpu.memory_space<vmem>>, %arg5: memref<1x128xf32, #tpu.memory_space<vmem>>, %arg6: memref<2x128xf32, #tpu.memory_space<vmem>>) attributes {dimension_semantics = [#tpu.dimension_semantics<parallel>], iteration_bounds = array<i64: 1>, scalar_prefetch = 0 : i64, scratch_operands = 0 : i64, tpu.core_type = #tpu.core_type<tc>, window_params = [{transform_indices = @transform_0, window_bounds = array<i64: 2, 1024>}, {pipeline_mode = #tpu.pipeline_mode<synchronous>, transform_indices = @transform_1, window_bounds = array<i64: 1024, 512>}, {pipeline_mode = #tpu.pipeline_mode<synchronous>, transform_indices = @transform_2, window_bounds = array<i64: 1, 512>}, {pipeline_mode = #tpu.pipeline_mode<synchronous>, transform_indices = @transform_3, window_bounds = array<i64: 512, 128>}, {pipeline_mode = #tpu.pipeline_mode<synchronous>, transform_indices = @transform_4, window_bounds = array<i64: 1, 128>}, {transform_indices = @transform_5, window_bounds = array<i64: 2, 128>}]} {
    %c0 = arith.constant 0 : index
    %c0_0 = arith.constant 0 : index
    %0 = vector.load %arg1[%c0, %c0_0] : memref<2x1024xf32, #tpu.memory_space<vmem>>, vector<2x1024xf32>
    %c0_1 = arith.constant 0 : index
    %c0_2 = arith.constant 0 : index
    %1 = vector.load %arg2[%c0_1, %c0_2] : memref<1024x512xf32, #tpu.memory_space<vmem>>, vector<1024x512xf32>
    %cst = arith.constant dense<0.000000e+00> : vector<2x512xf32>
    %2 = tpu.matmul %0, %1, %cst {dimension_numbers = #tpu.dot_dimension_numbers<[1], [0], [0], [1], [0, 0, 1, 1], [], []>} : vector<2x1024xf32>, vector<1024x512xf32>, vector<2x512xf32> -> vector<2x512xf32>
    %c0_3 = arith.constant 0 : index
    %c0_4 = arith.constant 0 : index
    %3 = vector.load %arg3[%c0_3, %c0_4] : memref<1x512xf32, #tpu.memory_space<vmem>>, vector<1x512xf32>
    %4 = vector.broadcast %3 : vector<1x512xf32> to vector<2x512xf32>
    %5 = arith.addf %2, %4 : vector<2x512xf32>
    %cst_5 = arith.constant 0.000000e+00 : f32
    %6 = vector.broadcast %cst_5 : f32 to vector<2x512xf32>
    %7 = arith.maximumf %5, %6 : vector<2x512xf32>
    %c0_6 = arith.constant 0 : index
    %c0_7 = arith.constant 0 : index
    %8 = vector.load %arg4[%c0_6, %c0_7] : memref<512x128xf32, #tpu.memory_space<vmem>>, vector<512x128xf32>
    %cst_8 = arith.constant dense<0.000000e+00> : vector<2x128xf32>
    %9 = tpu.matmul %7, %8, %cst_8 {dimension_numbers = #tpu.dot_dimension_numbers<[1], [0], [0], [1], [0, 0, 1, 1], [], []>} : vector<2x512xf32>, vector<512x128xf32>, vector<2x128xf32> -> vector<2x128xf32>
    %c0_9 = arith.constant 0 : index
    %c0_10 = arith.constant 0 : index
    %10 = vector.load %arg5[%c0_9, %c0_10] : memref<1x128xf32, #tpu.memory_space<vmem>>, vector<1x128xf32>
    %11 = vector.broadcast %10 : vector<1x128xf32> to vector<2x128xf32>
    %12 = arith.addf %9, %11 : vector<2x128xf32>
    %c0_11 = arith.constant 0 : index
    %c0_12 = arith.constant 0 : index
    %13 = vector.load %arg6[%c0_11, %c0_12] : memref<2x128xf32, #tpu.memory_space<vmem>>, vector<2x128xf32>
    tpu.vector_store %arg6[%c0_11, %c0_12], %12 {strides = array<i32>} : memref<2x128xf32, #tpu.memory_space<vmem>>, vector<2x128xf32>,
    return
  }
  func.func @transform_0(%arg0: i32) -> (i32, i32) {
    %c0_i32 = arith.constant 0 : i32
    %c0_i32_0 = arith.constant 0 : i32
    return %arg0, %c0_i32 : i32, i32
  }
  func.func @transform_1(%arg0: i32) -> (i32, i32) {
    %c0_i32 = arith.constant 0 : i32
    %c0_i32_0 = arith.constant 0 : i32
    %c0_i32_1 = arith.constant 0 : i32
    return %c0_i32, %c0_i32_0 : i32, i32
  }
  func.func @transform_2(%arg0: i32) -> (i32, i32) {
    %c0_i32 = arith.constant 0 : i32
    %c0_i32_0 = arith.constant 0 : i32
    %c0_i32_1 = arith.constant 0 : i32
    return %c0_i32, %c0_i32_0 : i32, i32
  }
  func.func @transform_3(%arg0: i32) -> (i32, i32) {
    %c0_i32 = arith.constant 0 : i32
    %c0_i32_0 = arith.constant 0 : i32
    %c0_i32_1 = arith.constant 0 : i32
    return %c0_i32, %c0_i32_0 : i32, i32
  }
  func.func @transform_4(%arg0: i32) -> (i32, i32) {
    %c0_i32 = arith.constant 0 : i32
    %c0_i32_0 = arith.constant 0 : i32
    %c0_i32_1 = arith.constant 0 : i32
    return %c0_i32, %c0_i32_0 : i32, i32
  }
  func.func @transform_5(%arg0: i32) -> (i32, i32) {
    %c0_i32 = arith.constant 0 : i32
    %c0_i32_0 = arith.constant 0 : i32
    return %arg0, %c0_i32 : i32, i32
  }
}

</mosaic_0001>

<llo_original>
// kernel: shared_mtl_forward.1
$region0: #{shared_mtl_forward.1}
  #allocation0 [shape = 'u32[]', space=smem, size = 0x4, offset = 0x4, fixed_abs, tag = 'smem constant byte address 0x4 - core index']
  #allocation1 [shape = 'u32[144,128]{1,0:T(1,128)}', space=vmem, size = 0x12000, scoped, tag = 'internal scratch']
  %s0 = inlined_call_operand.vmem [shape: f32[2,1024], index: 0, kind: input, shape index: {}]
  %s1 = inlined_call_operand.hbm [shape: f32[1024,512], index: 1, kind: input, shape index: {}]
  %s2 = inlined_call_operand.hbm [shape: f32[1,512], index: 2, kind: input, shape index: {}]
  %s3 = inlined_call_operand.hbm [shape: f32[512,128], index: 3, kind: input, shape index: {}]
  %s4 = inlined_call_operand.hbm [shape: f32[1,128], index: 4, kind: input, shape index: {}]
  %s5 = inlined_call_operand.hbm [shape: f32[2,128], index: 5, kind: output, shape index: {}]
  %s6 = sld [smem:[#allocation0]]
  $region46: #{shared_mtl_forward.1} parent=0
    _
  %s8 = ssub.s32 1, %s6
  %s9 = scalar_select 0, %s8, %s6
  $region1: #{shared_mtl_forward.1} parent=0
    #allocation2 [shape = 'u8[2097152]{0}', space=vmem, size = 0x200000, scoped, tag = 'input window, operand 1, single buffered']
    #allocation3 [shape = 's32[1]{0}', space=sflag, size = 0x4, scoped, tag = 'scoped memory for shared_mtl_forward.1']
    #allocation4 [shape = 's32[1]{0}', space=sflag, size = 0x4, scoped, tag = 'scoped memory for shared_mtl_forward.1']
    #allocation5 [shape = 'u8[2048]{0}', space=vmem, size = 0x800, scoped, tag = 'input window, operand 2, single buffered']
    #allocation6 [shape = 's32[1]{0}', space=sflag, size = 0x4, scoped, tag = 'scoped memory for shared_mtl_forward.1']
    #allocation7 [shape = 'u8[262144]{0}', space=vmem, size = 0x40000, scoped, tag = 'input window, operand 3, single buffered']
    #allocation8 [shape = 'u8[512]{0}', space=vmem, size = 0x400, scoped, tag = 'input window, operand 4, single buffered']
    #allocation9 [shape = 's32[1]{0}', space=sflag, size = 0x4, scoped, tag = 'scoped memory for shared_mtl_forward.1']
    #allocation10 [shape = 'u8[1024]{0}', space=vmem, size = 0x400, scoped, tag = 'output window, operand 0, single buffered']
    %10 = vsyncpa [#allocation3], 0
    %11 = vsyncpa [#allocation6], 0
    %12 = vsyncpa [#allocation9], 0
    %13 = vsyncpa [#allocation4], 0
    // Predicated region
    $region2: #{shared_mtl_forward.1} parent=1 // pred_check
      _
    $region3: #{shared_mtl_forward.1} parent=1 // pred_check_branch
      %15 = sbr.rel (0) target = $region5
    $region4: #{shared_mtl_forward.1} parent=1 // pred_region
      _
    $region5: #{shared_mtl_forward.1} parent=1 // pred_fallthru
      _
    // Predicated region
    $region6: #{shared_mtl_forward.1} parent=1 // pred_check
      _
    $region7: #{shared_mtl_forward.1} parent=1 // pred_check_branch
      %17 = sbr.rel (0) target = $region9
    $region8: #{shared_mtl_forward.1} parent=1 // pred_region
      %s19 = ssub.s32 65536, 65536
      %20 = vsyncadd [#allocation3], %s19
      %s21 = sshll.u32 [#allocation2], 4
      %s22 = int_to_ptr.vmem [resolvable:$true] %s21
      %27 = dma.hbm_to_vmem [thread:$0]  %s1, 65536, %s22, [#allocation3], 512, 512, 32
    $region9: #{shared_mtl_forward.1} parent=1 // pred_fallthru
      _
    // Predicated region
    $region10: #{shared_mtl_forward.1} parent=1 // pred_check
      _
    $region11: #{shared_mtl_forward.1} parent=1 // pred_check_branch
      %29 = sbr.rel (0) target = $region13
    $region12: #{shared_mtl_forward.1} parent=1 // pred_region
      %s31 = ssub.s32 64, 64
      %32 = vsyncadd [#allocation6], %s31
      %s34 = sshll.u32 [#allocation5], 4
      %s35 = int_to_ptr.vmem [resolvable:$true] %s34
      %37 = dma.hbm_to_vmem [thread:$0]  %s2, 64, %s35, [#allocation6]
    $region13: #{shared_mtl_forward.1} parent=1 // pred_fallthru
      _
    // Predicated region
    $region14: #{shared_mtl_forward.1} parent=1 // pred_check
      _
    $region15: #{shared_mtl_forward.1} parent=1 // pred_check_branch
      %39 = sbr.rel (0) target = $region17
    $region16: #{shared_mtl_forward.1} parent=1 // pred_region
      %s41 = ssub.s32 8192, 8192
      %42 = vsyncadd [#allocation6], %s41
      %s43 = sshll.u32 [#allocation7], 4
      %s44 = int_to_ptr.vmem [resolvable:$true] %s43
      %49 = dma.hbm_to_vmem [thread:$0]  %s3, 8192, %s44, [#allocation6], 128, 128, 8
    $region17: #{shared_mtl_forward.1} parent=1 // pred_fallthru
      _
    // Predicated region
    $region18: #{shared_mtl_forward.1} parent=1 // pred_check
      _
    $region19: #{shared_mtl_forward.1} parent=1 // pred_check_branch
      %51 = sbr.rel (0) target = $region21
    $region20: #{shared_mtl_forward.1} parent=1 // pred_region
      %s53 = ssub.s32 16, 16
      %54 = vsyncadd [#allocation9], %s53
      %s56 = sshll.u32 [#allocation8], 4
      %s57 = int_to_ptr.vmem [resolvable:$true] %s56
      %59 = dma.hbm_to_vmem [thread:$0]  %s4, 16, %s57, [#allocation9]
    $region21: #{shared_mtl_forward.1} parent=1 // pred_fallthru
      _
    // Predicated region
    $region22: #{shared_mtl_forward.1} parent=1 // pred_check
      _
    $region23: #{shared_mtl_forward.1} parent=1 // pred_check_branch
      %61 = sbr.rel (0) target = $region25
    $region24: #{shared_mtl_forward.1} parent=1 // pred_region
      %62 = dma.done [#allocation3], 65536
    $region25: #{shared_mtl_forward.1} parent=1 // pred_fallthru
      _
    // Predicated region
    $region26: #{shared_mtl_forward.1} parent=1 // pred_check
      _
    $region27: #{shared_mtl_forward.1} parent=1 // pred_check_branch
      %64 = sbr.rel (0) target = $region29
    $region28: #{shared_mtl_forward.1} parent=1 // pred_region
      %65 = dma.done [#allocation6], 64
    $region29: #{shared_mtl_forward.1} parent=1 // pred_fallthru
      _
    // Predicated region
    $region30: #{shared_mtl_forward.1} parent=1 // pred_check
      _
    $region31: #{shared_mtl_forward.1} parent=1 // pred_check_branch
      %67 = sbr.rel (0) target = $region33
    $region32: #{shared_mtl_forward.1} parent=1 // pred_region
      %68 = dma.done [#allocation6], 8192
    $region33: #{shared_mtl_forward.1} parent=1 // pred_fallthru
      _
    // Predicated region
    $region34: #{shared_mtl_forward.1} parent=1 // pred_check
      _
    $region35: #{shared_mtl_forward.1} parent=1 // pred_check_branch
      %70 = sbr.rel (0) target = $region37
    $region36: #{shared_mtl_forward.1} parent=1 // pred_region
      %71 = dma.done [#allocation9], 16
    $region37: #{shared_mtl_forward.1} parent=1 // pred_fallthru
      _
    %v72 = vld [vmem:[%s0] sm:$0xff]
    %v73 = vld [vmem:[%s0 + $0x8] sm:$0xff]
    %v74 = vld [vmem:[#allocation2] sm:$0xff]
    %v75 = vld [vmem:[#allocation2 + $0x8] sm:$0xff]
    %v76 = vld [vmem:[#allocation2 + $0x10] sm:$0xff]
    %v77 = vld [vmem:[#allocation2 + $0x18] sm:$0xff]
    %v78 = vld [vmem:[#allocation2 + $0x20] sm:$0xff]
    %v79 = vld [vmem:[#allocation2 + $0x28] sm:$0xff]
    %v80 = vld [vmem:[#allocation2 + $0x30] sm:$0xff]
    %v81 = vld [vmem:[#allocation2 + $0x38] sm:$0xff]
    %v82 = vld [vmem:[#allocation2 + $0x40] sm:$0xff]
    %v83 = vld [vmem:[#allocation2 + $0x48] sm:$0xff]
    %v84 = vld [vmem:[#allocation2 + $0x50] sm:$0xff]
    %v85 = vld [vmem:[#allocation2 + $0x58] sm:$0xff]
    %v86 = vld [vmem:[#allocation2 + $0x60] sm:$0xff]
    %v87 = vld [vmem:[#allocation2 + $0x68] sm:$0xff]
    %v88 = vld [vmem:[#allocation2 + $0x70] sm:$0xff]
    %v89 = vld [vmem:[#allocation2 + $0x78] sm:$0xff]
    %v90 = vld [vmem:[#allocation2 + $0x80] sm:$0xff]
    %v91 = vld [vmem:[#allocation2 + $0x88] sm:$0xff]
    %v92 = vld [vmem:[#allocation2 + $0x90] sm:$0xff]
    %v93 = vld [vmem:[#allocation2 + $0x98] sm:$0xff]
    %v94 = vld [vmem:[#allocation2 + $0xa0] sm:$0xff]
    %v95 = vld [vmem:[#allocation2 + $0xa8] sm:$0xff]
    %v96 = vld [vmem:[#allocation2 + $0xb0] sm:$0xff]
    %v97 = vld [vmem:[#allocation2 + $0xb8] sm:$0xff]
    %v98 = vld [vmem:[#allocation2 + $0xc0] sm:$0xff]
    %v99 = vld [vmem:[#allocation2 + $0xc8] sm:$0xff]
    %v100 = vld [vmem:[#allocation2 + $0xd0] sm:$0xff]
    %v101 = vld [vmem:[#allocation2 + $0xd8] sm:$0xff]
    %v102 = vld [vmem:[#allocation2 + $0xe0] sm:$0xff]
    %v103 = vld [vmem:[#allocation2 + $0xe8] sm:$0xff]
    %v104 = vld [vmem:[#allocation2 + $0xf0] sm:$0xff]
    %v105 = vld [vmem:[#allocation2 + $0xf8] sm:$0xff]
    %v106 = vld [vmem:[#allocation2 + $0x100] sm:$0xff]
    %v107 = vld [vmem:[#allocation2 + $0x108] sm:$0xff]
    %v108 = vld [vmem:[#allocation2 + $0x110] sm:$0xff]
    %v109 = vld [vmem:[#allocation2 + $0x118] sm:$0xff]
    %v110 = vld [vmem:[#allocation2 + $0x120] sm:$0xff]
    %v111 = vld [vmem:[#allocation2 + $0x128] sm:$0xff]
    %v112 = vld [vmem:[#allocation2 + $0x130] sm:$0xff]
    %v113 = vld [vmem:[#allocation2 + $0x138] sm:$0xff]
    %v114 = vld [vmem:[#allocation2 + $0x140] sm:$0xff]
    %v115 = vld [vmem:[#allocation2 + $0x148] sm:$0xff]
    %v116 = vld [vmem:[#allocation2 + $0x150] sm:$0xff]
    %v117 = vld [vmem:[#allocation2 + $0x158] sm:$0xff]
    %v118 = vld [vmem:[#allocation2 + $0x160] sm:$0xff]
    %v119 = vld [vmem:[#allocation2 + $0x168] sm:$0xff]
    %v120 = vld [vmem:[#allocation2 + $0x170] sm:$0xff]
    %v121 = vld [vmem:[#allocation2 + $0x178] sm:$0xff]
    %v122 = vld [vmem:[#allocation2 + $0x180] sm:$0xff]
    %v123 = vld [vmem:[#allocation2 + $0x188] sm:$0xff]
    %v124 = vld [vmem:[#allocation2 + $0x190] sm:$0xff]
    %v125 = vld [vmem:[#allocation2 + $0x198] sm:$0xff]
    %v126 = vld [vmem:[#allocation2 + $0x1a0] sm:$0xff]
    %v127 = vld [vmem:[#allocation2 + $0x1a8] sm:$0xff]
    %v128 = vld [vmem:[#allocation2 + $0x1b0] sm:$0xff]
    %v129 = vld [vmem:[#allocation2 + $0x1b8] sm:$0xff]
    %v130 = vld [vmem:[#allocation2 + $0x1c0] sm:$0xff]
    %v131 = vld [vmem:[#allocation2 + $0x1c8] sm:$0xff]
    %v132 = vld [vmem:[#allocation2 + $0x1d0] sm:$0xff]
    %v133 = vld [vmem:[#allocation2 + $0x1d8] sm:$0xff]
    %v134 = vld [vmem:[#allocation2 + $0x1e0] sm:$0xff]
    %v135 = vld [vmem:[#allocation2 + $0x1e8] sm:$0xff]
    %v136 = vld [vmem:[#allocation2 + $0x1f0] sm:$0xff]
    %v137 = vld [vmem:[#allocation2 + $0x1f8] sm:$0xff]
    %v138 = vld [vmem:[#allocation2 + $0x200] sm:$0xff]
    %v139 = vld [vmem:[#allocation2 + $0x208] sm:$0xff]
    %v140 = vld [vmem:[#allocation2 + $0x210] sm:$0xff]
    %v141 = vld [vmem:[#allocation2 + $0x218] sm:$0xff]
    %v142 = vld [vmem:[#allocation2 + $0x220] sm:$0xff]
    %v143 = vld [vmem:[#allocation2 + $0x228] sm:$0xff]
    %v144 = vld [vmem:[#allocation2 + $0x230] sm:$0xff]
    %v145 = vld [vmem:[#allocation2 + $0x238] sm:$0xff]
    %v146 = vld [vmem:[#allocation2 + $0x240] sm:$0xff]
    %v147 = vld [vmem:[#allocation2 + $0x248] sm:$0xff]
    %v148 = vld [vmem:[#allocation2 + $0x250] sm:$0xff]
    %v149 = vld [vmem:[#allocation2 + $0x258] sm:$0xff]
    %v150 = vld [vmem:[#allocation2 + $0x260] sm:$0xff]
    %v151 = vld [vmem:[#allocation2 + $0x268] sm:$0xff]
    %v152 = vld [vmem:[#allocation2 + $0x270] sm:$0xff]
    %v153 = vld [vmem:[#allocation2 + $0x278] sm:$0xff]
    %v154 = vld [vmem:[#allocation2 + $0x280] sm:$0xff]
    %v155 = vld [vmem:[#allocation2 + $0x288] sm:$0xff]
    %v156 = vld [vmem:[#allocation2 + $0x290] sm:$0xff]
    %v157 = vld [vmem:[#allocation2 + $0x298] sm:$0xff]
    %v158 = vld [vmem:[#allocation2 + $0x2a0] sm:$0xff]
    %v159 = vld [vmem:[#allocation2 + $0x2a8] sm:$0xff]
    %v160 = vld [vmem:[#allocation2 + $0x2b0] sm:$0xff]
    %v161 = vld [vmem:[#allocation2 + $0x2b8] sm:$0xff]
    %v162 = vld [vmem:[#allocation2 + $0x2c0] sm:$0xff]
    %v163 = vld [vmem:[#allocation2 + $0x2c8] sm:$0xff]
    %v164 = vld [vmem:[#allocation2 + $0x2d0] sm:$0xff]
    %v165 = vld [vmem:[#allocation2 + $0x2d8] sm:$0xff]
    %v166 = vld [vmem:[#allocation2 + $0x2e0] sm:$0xff]
    %v167 = vld [vmem:[#allocation2 + $0x2e8] sm:$0xff]
    %v168 = vld [vmem:[#allocation2 + $0x2f0] sm:$0xff]
    %v169 = vld [vmem:[#allocation2 + $0x2f8] sm:$0xff]
    %v170 = vld [vmem:[#allocation2 + $0x300] sm:$0xff]
    %v171 = vld [vmem:[#allocation2 + $0x308] sm:$0xff]
    %v172 = vld [vmem:[#allocation2 + $0x310] sm:$0xff]
    %v173 = vld [vmem:[#allocation2 + $0x318] sm:$0xff]
    %v174 = vld [vmem:[#allocation2 + $0x320] sm:$0xff]
    %v175 = vld [vmem:[#allocation2 + $0x328] sm:$0xff]
    %v176 = vld [vmem:[#allocation2 + $0x330] sm:$0xff]
    %v177 = vld [vmem:[#allocation2 + $0x338] sm:$0xff]
    %v178 = vld [vmem:[#allocation2 + $0x340] sm:$0xff]
    %v179 = vld [vmem:[#allocation2 + $0x348] sm:$0xff]
    %v180 = vld [vmem:[#allocation2 + $0x350] sm:$0xff]
    %v181 = vld [vmem:[#allocation2 + $0x358] sm:$0xff]
    %v182 = vld [vmem:[#allocation2 + $0x360] sm:$0xff]
    %v183 = vld [vmem:[#allocation2 + $0x368] sm:$0xff]
    %v184 = vld [vmem:[#allocation2 + $0x370] sm:$0xff]
    %v185 = vld [vmem:[#allocation2 + $0x378] sm:$0xff]
    %v186 = vld [vmem:[#allocation2 + $0x380] sm:$0xff]
    %v187 = vld [vmem:[#allocation2 + $0x388] sm:$0xff]
    %v188 = vld [vmem:[#allocation2 + $0x390] sm:$0xff]
    %v189 = vld [vmem:[#allocation2 + $0x398] sm:$0xff]
    %v190 = vld [vmem:[#allocation2 + $0x3a0] sm:$0xff]
    %v191 = vld [vmem:[#allocation2 + $0x3a8] sm:$0xff]
    %v192 = vld [vmem:[#allocation2 + $0x3b0] sm:$0xff]
    %v193 = vld [vmem:[#allocation2 + $0x3b8] sm:$0xff]
    %v194 = vld [vmem:[#allocation2 + $0x3c0] sm:$0xff]
    %v195 = vld [vmem:[#allocation2 + $0x3c8] sm:$0xff]
    %v196 = vld [vmem:[#allocation2 + $0x3d0] sm:$0xff]
    %v197 = vld [vmem:[#allocation2 + $0x3d8] sm:$0xff]
    %v198 = vld [vmem:[#allocation2 + $0x3e0] sm:$0xff]
    %v199 = vld [vmem:[#allocation2 + $0x3e8] sm:$0xff]
    %v200 = vld [vmem:[#allocation2 + $0x3f0] sm:$0xff]
    %v201 = vld [vmem:[#allocation2 + $0x3f8] sm:$0xff]
    %v202 = vld [vmem:[#allocation2 + $0x400] sm:$0xff]
    %v203 = vld [vmem:[#allocation2 + $0x408] sm:$0xff]
    %v204 = vld [vmem:[#allocation2 + $0x410] sm:$0xff]
    %v205 = vld [vmem:[#allocation2 + $0x418] sm:$0xff]
    %v206 = vld [vmem:[#allocation2 + $0x420] sm:$0xff]
    %v207 = vld [vmem:[#allocation2 + $0x428] sm:$0xff]
    %v208 = vld [vmem:[#allocation2 + $0x430] sm:$0xff]
    %v209 = vld [vmem:[#allocation2 + $0x438] sm:$0xff]
    %v210 = vld [vmem:[#allocation2 + $0x440] sm:$0xff]
    %v211 = vld [vmem:[#allocation2 + $0x448] sm:$0xff]
    %v212 = vld [vmem:[#allocation2 + $0x450] sm:$0xff]
    %v213 = vld [vmem:[#allocation2 + $0x458] sm:$0xff]
    %v214 = vld [vmem:[#allocation2 + $0x460] sm:$0xff]
    %v215 = vld [vmem:[#allocation2 + $0x468] sm:$0xff]
    %v216 = vld [vmem:[#allocation2 + $0x470] sm:$0xff]
    %v217 = vld [vmem:[#allocation2 + $0x478] sm:$0xff]
    %v218 = vld [vmem:[#allocation2 + $0x480] sm:$0xff]
    %v219 = vld [vmem:[#allocation2 + $0x488] sm:$0xff]
    %v220 = vld [vmem:[#allocation2 + $0x490] sm:$0xff]
    %v221 = vld [vmem:[#allocation2 + $0x498] sm:$0xff]
    %v222 = vld [vmem:[#allocation2 + $0x4a0] sm:$0xff]
    %v223 = vld [vmem:[#allocation2 + $0x4a8] sm:$0xff]
    %v224 = vld [vmem:[#allocation2 + $0x4b0] sm:$0xff]
    %v225 = vld [vmem:[#allocation2 + $0x4b8] sm:$0xff]
    %v226 = vld [vmem:[#allocation2 + $0x4c0] sm:$0xff]
    %v227 = vld [vmem:[#allocation2 + $0x4c8] sm:$0xff]
    %v228 = vld [vmem:[#allocation2 + $0x4d0] sm:$0xff]
    %v229 = vld [vmem:[#allocation2 + $0x4d8] sm:$0xff]
    %v230 = vld [vmem:[#allocation2 + $0x4e0] sm:$0xff]
    %v231 = vld [vmem:[#allocation2 + $0x4e8] sm:$0xff]
    %v232 = vld [vmem:[#allocation2 + $0x4f0] sm:$0xff]
    %v233 = vld [vmem:[#allocation2 + $0x4f8] sm:$0xff]
    %v234 = vld [vmem:[#allocation2 + $0x500] sm:$0xff]
    %v235 = vld [vmem:[#allocation2 + $0x508] sm:$0xff]
    %v236 = vld [vmem:[#allocation2 + $0x510] sm:$0xff]
    %v237 = vld [vmem:[#allocation2 + $0x518] sm:$0xff]
    %v238 = vld [vmem:[#allocation2 + $0x520] sm:$0xff]
    %v239 = vld [vmem:[#allocation2 + $0x528] sm:$0xff]
    %v240 = vld [vmem:[#allocation2 + $0x530] sm:$0xff]
    %v241 = vld [vmem:[#allocation2 + $0x538] sm:$0xff]
    %v242 = vld [vmem:[#allocation2 + $0x540] sm:$0xff]
    %v243 = vld [vmem:[#allocation2 + $0x548] sm:$0xff]
    %v244 = vld [vmem:[#allocation2 + $0x550] sm:$0xff]
    %v245 = vld [vmem:[#allocation2 + $0x558] sm:$0xff]
    %v246 = vld [vmem:[#allocation2 + $0x560] sm:$0xff]
    %v247 = vld [vmem:[#allocation2 + $0x568] sm:$0xff]
    %v248 = vld [vmem:[#allocation2 + $0x570] sm:$0xff]
    %v249 = vld [vmem:[#allocation2 + $0x578] sm:$0xff]
    %v250 = vld [vmem:[#allocation2 + $0x580] sm:$0xff]
    %v251 = vld [vmem:[#allocation2 + $0x588] sm:$0xff]
    %v252 = vld [vmem:[#allocation2 + $0x590] sm:$0xff]
    %v253 = vld [vmem:[#allocation2 + $0x598] sm:$0xff]
    %v254 = vld [vmem:[#allocation2 + $0x5a0] sm:$0xff]
    %v255 = vld [vmem:[#allocation2 + $0x5a8] sm:$0xff]
    %v256 = vld [vmem:[#allocation2 + $0x5b0] sm:$0xff]
    %v257 = vld [vmem:[#allocation2 + $0x5b8] sm:$0xff]
    %v258 = vld [vmem:[#allocation2 + $0x5c0] sm:$0xff]
    %v259 = vld [vmem:[#allocation2 + $0x5c8] sm:$0xff]
    %v260 = vld [vmem:[#allocation2 + $0x5d0] sm:$0xff]
    %v261 = vld [vmem:[#allocation2 + $0x5d8] sm:$0xff]
    %v262 = vld [vmem:[#allocation2 + $0x5e0] sm:$0xff]
    %v263 = vld [vmem:[#allocation2 + $0x5e8] sm:$0xff]
    %v264 = vld [vmem:[#allocation2 + $0x5f0] sm:$0xff]
    %v265 = vld [vmem:[#allocation2 + $0x5f8] sm:$0xff]
    %v266 = vld [vmem:[#allocation2 + $0x600] sm:$0xff]
    %v267 = vld [vmem:[#allocation2 + $0x608] sm:$0xff]
    %v268 = vld [vmem:[#allocation2 + $0x610] sm:$0xff]
    %v269 = vld [vmem:[#allocation2 + $0x618] sm:$0xff]
    %v270 = vld [vmem:[#allocation2 + $0x620] sm:$0xff]
    %v271 = vld [vmem:[#allocation2 + $0x628] sm:$0xff]
    %v272 = vld [vmem:[#allocation2 + $0x630] sm:$0xff]
    %v273 = vld [vmem:[#allocation2 + $0x638] sm:$0xff]
    %v274 = vld [vmem:[#allocation2 + $0x640] sm:$0xff]
    %v275 = vld [vmem:[#allocation2 + $0x648] sm:$0xff]
    %v276 = vld [vmem:[#allocation2 + $0x650] sm:$0xff]
    %v277 = vld [vmem:[#allocation2 + $0x658] sm:$0xff]
    %v278 = vld [vmem:[#allocation2 + $0x660] sm:$0xff]
    %v279 = vld [vmem:[#allocation2 + $0x668] sm:$0xff]
    %v280 = vld [vmem:[#allocation2 + $0x670] sm:$0xff]
    %v281 = vld [vmem:[#allocation2 + $0x678] sm:$0xff]
    %v282 = vld [vmem:[#allocation2 + $0x680] sm:$0xff]
    %v283 = vld [vmem:[#allocation2 + $0x688] sm:$0xff]
    %v284 = vld [vmem:[#allocation2 + $0x690] sm:$0xff]
    %v285 = vld [vmem:[#allocation2 + $0x698] sm:$0xff]
    %v286 = vld [vmem:[#allocation2 + $0x6a0] sm:$0xff]
    %v287 = vld [vmem:[#allocation2 + $0x6a8] sm:$0xff]
    %v288 = vld [vmem:[#allocation2 + $0x6b0] sm:$0xff]
    %v289 = vld [vmem:[#allocation2 + $0x6b8] sm:$0xff]
    %v290 = vld [vmem:[#allocation2 + $0x6c0] sm:$0xff]
    %v291 = vld [vmem:[#allocation2 + $0x6c8] sm:$0xff]
    %v292 = vld [vmem:[#allocation2 + $0x6d0] sm:$0xff]
    %v293 = vld [vmem:[#allocation2 + $0x6d8] sm:$0xff]
    %v294 = vld [vmem:[#allocation2 + $0x6e0] sm:$0xff]
    %v295 = vld [vmem:[#allocation2 + $0x6e8] sm:$0xff]
    %v296 = vld [vmem:[#allocation2 + $0x6f0] sm:$0xff]
    %v297 = vld [vmem:[#allocation2 + $0x6f8] sm:$0xff]
    %v298 = vld [vmem:[#allocation2 + $0x700] sm:$0xff]
    %v299 = vld [vmem:[#allocation2 + $0x708] sm:$0xff]
    %v300 = vld [vmem:[#allocation2 + $0x710] sm:$0xff]
    %v301 = vld [vmem:[#allocation2 + $0x718] sm:$0xff]
    %v302 = vld [vmem:[#allocation2 + $0x720] sm:$0xff]
    %v303 = vld [vmem:[#allocation2 + $0x728] sm:$0xff]
    %v304 = vld [vmem:[#allocation2 + $0x730] sm:$0xff]
    %v305 = vld [vmem:[#allocation2 + $0x738] sm:$0xff]
    %v306 = vld [vmem:[#allocation2 + $0x740] sm:$0xff]
    %v307 = vld [vmem:[#allocation2 + $0x748] sm:$0xff]
    %v308 = vld [vmem:[#allocation2 + $0x750] sm:$0xff]
    %v309 = vld [vmem:[#allocation2 + $0x758] sm:$0xff]
    %v310 = vld [vmem:[#allocation2 + $0x760] sm:$0xff]
    %v311 = vld [vmem:[#allocation2 + $0x768] sm:$0xff]
    %v312 = vld [vmem:[#allocation2 + $0x770] sm:$0xff]
    %v313 = vld [vmem:[#allocation2 + $0x778] sm:$0xff]
    %v314 = vld [vmem:[#allocation2 + $0x780] sm:$0xff]
    %v315 = vld [vmem:[#allocation2 + $0x788] sm:$0xff]
    %v316 = vld [vmem:[#allocation2 + $0x790] sm:$0xff]
    %v317 = vld [vmem:[#allocation2 + $0x798] sm:$0xff]
    %v318 = vld [vmem:[#allocation2 + $0x7a0] sm:$0xff]
    %v319 = vld [vmem:[#allocation2 + $0x7a8] sm:$0xff]
    %v320 = vld [vmem:[#allocation2 + $0x7b0] sm:$0xff]
    %v321 = vld [vmem:[#allocation2 + $0x7b8] sm:$0xff]
    %v322 = vld [vmem:[#allocation2 + $0x7c0] sm:$0xff]
    %v323 = vld [vmem:[#allocation2 + $0x7c8] sm:$0xff]
    %v324 = vld [vmem:[#allocation2 + $0x7d0] sm:$0xff]
    %v325 = vld [vmem:[#allocation2 + $0x7d8] sm:$0xff]
    %v326 = vld [vmem:[#allocation2 + $0x7e0] sm:$0xff]
    %v327 = vld [vmem:[#allocation2 + $0x7e8] sm:$0xff]
    %v328 = vld [vmem:[#allocation2 + $0x7f0] sm:$0xff]
    %v329 = vld [vmem:[#allocation2 + $0x7f8] sm:$0xff]
    %v330 = vld [vmem:[#allocation2 + $0x800] sm:$0xff]
    %v331 = vld [vmem:[#allocation2 + $0x808] sm:$0xff]
    %v332 = vld [vmem:[#allocation2 + $0x810] sm:$0xff]
    %v333 = vld [vmem:[#allocation2 + $0x818] sm:$0xff]
    %v334 = vld [vmem:[#allocation2 + $0x820] sm:$0xff]
    %v335 = vld [vmem:[#allocation2 + $0x828] sm:$0xff]
    %v336 = vld [vmem:[#allocation2 + $0x830] sm:$0xff]
    %v337 = vld [vmem:[#allocation2 + $0x838] sm:$0xff]
    %v338 = vld [vmem:[#allocation2 + $0x840] sm:$0xff]
    %v339 = vld [vmem:[#allocation2 + $0x848] sm:$0xff]
    %v340 = vld [vmem:[#allocation2 + $0x850] sm:$0xff]
    %v341 = vld [vmem:[#allocation2 + $0x858] sm:$0xff]
    %v342 = vld [vmem:[#allocation2 + $0x860] sm:$0xff]
    %v343 = vld [vmem:[#allocation2 + $0x868] sm:$0xff]
    %v344 = vld [vmem:[#allocation2 + $0x870] sm:$0xff]
    %v345 = vld [vmem:[#allocation2 + $0x878] sm:$0xff]
    %v346 = vld [vmem:[#allocation2 + $0x880] sm:$0xff]
    %v347 = vld [vmem:[#allocation2 + $0x888] sm:$0xff]
    %v348 = vld [vmem:[#allocation2 + $0x890] sm:$0xff]
    %v349 = vld [vmem:[#allocation2 + $0x898] sm:$0xff]
    %v350 = vld [vmem:[#allocation2 + $0x8a0] sm:$0xff]
    %v351 = vld [vmem:[#allocation2 + $0x8a8] sm:$0xff]
    %v352 = vld [vmem:[#allocation2 + $0x8b0] sm:$0xff]
    %v353 = vld [vmem:[#allocation2 + $0x8b8] sm:$0xff]
    %v354 = vld [vmem:[#allocation2 + $0x8c0] sm:$0xff]
    %v355 = vld [vmem:[#allocation2 + $0x8c8] sm:$0xff]
    %v356 = vld [vmem:[#allocation2 + $0x8d0] sm:$0xff]
    %v357 = vld [vmem:[#allocation2 + $0x8d8] sm:$0xff]
    %v358 = vld [vmem:[#allocation2 + $0x8e0] sm:$0xff]
    %v359 = vld [vmem:[#allocation2 + $0x8e8] sm:$0xff]
    %v360 = vld [vmem:[#allocation2 + $0x8f0] sm:$0xff]
    %v361 = vld [vmem:[#allocation2 + $0x8f8] sm:$0xff]
    %v362 = vld [vmem:[#allocation2 + $0x900] sm:$0xff]
    %v363 = vld [vmem:[#allocation2 + $0x908] sm:$0xff]
    %v364 = vld [vmem:[#allocation2 + $0x910] sm:$0xff]
    %v365 = vld [vmem:[#allocation2 + $0x918] sm:$0xff]
    %v366 = vld [vmem:[#allocation2 + $0x920] sm:$0xff]
    %v367 = vld [vmem:[#allocation2 + $0x928] sm:$0xff]
    %v368 = vld [vmem:[#allocation2 + $0x930] sm:$0xff]
    %v369 = vld [vmem:[#allocation2 + $0x938] sm:$0xff]
    %v370 = vld [vmem:[#allocation2 + $0x940] sm:$0xff]
    %v371 = vld [vmem:[#allocation2 + $0x948] sm:$0xff]
    %v372 = vld [vmem:[#allocation2 + $0x950] sm:$0xff]
    %v373 = vld [vmem:[#allocation2 + $0x958] sm:$0xff]
    %v374 = vld [vmem:[#allocation2 + $0x960] sm:$0xff]
    %v375 = vld [vmem:[#allocation2 + $0x968] sm:$0xff]
    %v376 = vld [vmem:[#allocation2 + $0x970] sm:$0xff]
    %v377 = vld [vmem:[#allocation2 + $0x978] sm:$0xff]
    %v378 = vld [vmem:[#allocation2 + $0x980] sm:$0xff]
    %v379 = vld [vmem:[#allocation2 + $0x988] sm:$0xff]
    %v380 = vld [vmem:[#allocation2 + $0x990] sm:$0xff]
    %v381 = vld [vmem:[#allocation2 + $0x998] sm:$0xff]
    %v382 = vld [vmem:[#allocation2 + $0x9a0] sm:$0xff]
    %v383 = vld [vmem:[#allocation2 + $0x9a8] sm:$0xff]
    %v384 = vld [vmem:[#allocation2 + $0x9b0] sm:$0xff]
    %v385 = vld [vmem:[#allocation2 + $0x9b8] sm:$0xff]
    %v386 = vld [vmem:[#allocation2 + $0x9c0] sm:$0xff]
    %v387 = vld [vmem:[#allocation2 + $0x9c8] sm:$0xff]
    %v388 = vld [vmem:[#allocation2 + $0x9d0] sm:$0xff]
    %v389 = vld [vmem:[#allocation2 + $0x9d8] sm:$0xff]
    %v390 = vld [vmem:[#allocation2 + $0x9e0] sm:$0xff]
    %v391 = vld [vmem:[#allocation2 + $0x9e8] sm:$0xff]
    %v392 = vld [vmem:[#allocation2 + $0x9f0] sm:$0xff]
    %v393 = vld [vmem:[#allocation2 + $0x9f8] sm:$0xff]
    %v394 = vld [vmem:[#allocation2 + $0xa00] sm:$0xff]
    %v395 = vld [vmem:[#allocation2 + $0xa08] sm:$0xff]
    %v396 = vld [vmem:[#allocation2 + $0xa10] sm:$0xff]
    %v397 = vld [vmem:[#allocation2 + $0xa18] sm:$0xff]
    %v398 = vld [vmem:[#allocation2 + $0xa20] sm:$0xff]
    %v399 = vld [vmem:[#allocation2 + $0xa28] sm:$0xff]
    %v400 = vld [vmem:[#allocation2 + $0xa30] sm:$0xff]
    %v401 = vld [vmem:[#allocation2 + $0xa38] sm:$0xff]
    %v402 = vld [vmem:[#allocation2 + $0xa40] sm:$0xff]
    %v403 = vld [vmem:[#allocation2 + $0xa48] sm:$0xff]
    %v404 = vld [vmem:[#allocation2 + $0xa50] sm:$0xff]
    %v405 = vld [vmem:[#allocation2 + $0xa58] sm:$0xff]
    %v406 = vld [vmem:[#allocation2 + $0xa60] sm:$0xff]
    %v407 = vld [vmem:[#allocation2 + $0xa68] sm:$0xff]
    %v408 = vld [vmem:[#allocation2 + $0xa70] sm:$0xff]
    %v409 = vld [vmem:[#allocation2 + $0xa78] sm:$0xff]
    %v410 = vld [vmem:[#allocation2 + $0xa80] sm:$0xff]
    %v411 = vld [vmem:[#allocation2 + $0xa88] sm:$0xff]
    %v412 = vld [vmem:[#allocation2 + $0xa90] sm:$0xff]
    %v413 = vld [vmem:[#allocation2 + $0xa98] sm:$0xff]
    %v414 = vld [vmem:[#allocation2 + $0xaa0] sm:$0xff]
    %v415 = vld [vmem:[#allocation2 + $0xaa8] sm:$0xff]
    %v416 = vld [vmem:[#allocation2 + $0xab0] sm:$0xff]
    %v417 = vld [vmem:[#allocation2 + $0xab8] sm:$0xff]
    %v418 = vld [vmem:[#allocation2 + $0xac0] sm:$0xff]
    %v419 = vld [vmem:[#allocation2 + $0xac8] sm:$0xff]
    %v420 = vld [vmem:[#allocation2 + $0xad0] sm:$0xff]
    %v421 = vld [vmem:[#allocation2 + $0xad8] sm:$0xff]
    %v422 = vld [vmem:[#allocation2 + $0xae0] sm:$0xff]
    %v423 = vld [vmem:[#allocation2 + $0xae8] sm:$0xff]
    %v424 = vld [vmem:[#allocation2 + $0xaf0] sm:$0xff]
    %v425 = vld [vmem:[#allocation2 + $0xaf8] sm:$0xff]
    %v426 = vld [vmem:[#allocation2 + $0xb00] sm:$0xff]
    %v427 = vld [vmem:[#allocation2 + $0xb08] sm:$0xff]
    %v428 = vld [vmem:[#allocation2 + $0xb10] sm:$0xff]
    %v429 = vld [vmem:[#allocation2 + $0xb18] sm:$0xff]
    %v430 = vld [vmem:[#allocation2 + $0xb20] sm:$0xff]
    %v431 = vld [vmem:[#allocation2 + $0xb28] sm:$0xff]
    %v432 = vld [vmem:[#allocation2 + $0xb30] sm:$0xff]
    %v433 = vld [vmem:[#allocation2 + $0xb38] sm:$0xff]
    %v434 = vld [vmem:[#allocation2 + $0xb40] sm:$0xff]
    %v435 = vld [vmem:[#allocation2 + $0xb48] sm:$0xff]
    %v436 = vld [vmem:[#allocation2 + $0xb50] sm:$0xff]
    %v437 = vld [vmem:[#allocation2 + $0xb58] sm:$0xff]
    %v438 = vld [vmem:[#allocation2 + $0xb60] sm:$0xff]
    %v439 = vld [vmem:[#allocation2 + $0xb68] sm:$0xff]
    %v440 = vld [vmem:[#allocation2 + $0xb70] sm:$0xff]
    %v441 = vld [vmem:[#allocation2 + $0xb78] sm:$0xff]
    %v442 = vld [vmem:[#allocation2 + $0xb80] sm:$0xff]
    %v443 = vld [vmem:[#allocation2 + $0xb88] sm:$0xff]
    %v444 = vld [vmem:[#allocation2 + $0xb90] sm:$0xff]
    %v445 = vld [vmem:[#allocation2 + $0xb98] sm:$0xff]
    %v446 = vld [vmem:[#allocation2 + $0xba0] sm:$0xff]
    %v447 = vld [vmem:[#allocation2 + $0xba8] sm:$0xff]
    %v448 = vld [vmem:[#allocation2 + $0xbb0] sm:$0xff]
    %v449 = vld [vmem:[#allocation2 + $0xbb8] sm:$0xff]
    %v450 = vld [vmem:[#allocation2 + $0xbc0] sm:$0xff]
    %v451 = vld [vmem:[#allocation2 + $0xbc8] sm:$0xff]
    %v452 = vld [vmem:[#allocation2 + $0xbd0] sm:$0xff]
    %v453 = vld [vmem:[#allocation2 + $0xbd8] sm:$0xff]
    %v454 = vld [vmem:[#allocation2 + $0xbe0] sm:$0xff]
    %v455 = vld [vmem:[#allocation2 + $0xbe8] sm:$0xff]
    %v456 = vld [vmem:[#allocation2 + $0xbf0] sm:$0xff]
    %v457 = vld [vmem:[#allocation2 + $0xbf8] sm:$0xff]
    %v458 = vld [vmem:[#allocation2 + $0xc00] sm:$0xff]
    %v459 = vld [vmem:[#allocation2 + $0xc08] sm:$0xff]
    %v460 = vld [vmem:[#allocation2 + $0xc10] sm:$0xff]
    %v461 = vld [vmem:[#allocation2 + $0xc18] sm:$0xff]
    %v462 = vld [vmem:[#allocation2 + $0xc20] sm:$0xff]
    %v463 = vld [vmem:[#allocation2 + $0xc28] sm:$0xff]
    %v464 = vld [vmem:[#allocation2 + $0xc30] sm:$0xff]
    %v465 = vld [vmem:[#allocation2 + $0xc38] sm:$0xff]
    %v466 = vld [vmem:[#allocation2 + $0xc40] sm:$0xff]
    %v467 = vld [vmem:[#allocation2 + $0xc48] sm:$0xff]
    %v468 = vld [vmem:[#allocation2 + $0xc50] sm:$0xff]
    %v469 = vld [vmem:[#allocation2 + $0xc58] sm:$0xff]
    %v470 = vld [vmem:[#allocation2 + $0xc60] sm:$0xff]
    %v471 = vld [vmem:[#allocation2 + $0xc68] sm:$0xff]
    %v472 = vld [vmem:[#allocation2 + $0xc70] sm:$0xff]
    %v473 = vld [vmem:[#allocation2 + $0xc78] sm:$0xff]
    %v474 = vld [vmem:[#allocation2 + $0xc80] sm:$0xff]
    %v475 = vld [vmem:[#allocation2 + $0xc88] sm:$0xff]
    %v476 = vld [vmem:[#allocation2 + $0xc90] sm:$0xff]
    %v477 = vld [vmem:[#allocation2 + $0xc98] sm:$0xff]
    %v478 = vld [vmem:[#allocation2 + $0xca0] sm:$0xff]
    %v479 = vld [vmem:[#allocation2 + $0xca8] sm:$0xff]
    %v480 = vld [vmem:[#allocation2 + $0xcb0] sm:$0xff]
    %v481 = vld [vmem:[#allocation2 + $0xcb8] sm:$0xff]
    %v482 = vld [vmem:[#allocation2 + $0xcc0] sm:$0xff]
    %v483 = vld [vmem:[#allocation2 + $0xcc8] sm:$0xff]
    %v484 = vld [vmem:[#allocation2 + $0xcd0] sm:$0xff]
    %v485 = vld [vmem:[#allocation2 + $0xcd8] sm:$0xff]
    %v486 = vld [vmem:[#allocation2 + $0xce0] sm:$0xff]
    %v487 = vld [vmem:[#allocation2 + $0xce8] sm:$0xff]
    %v488 = vld [vmem:[#allocation2 + $0xcf0] sm:$0xff]
    %v489 = vld [vmem:[#allocation2 + $0xcf8] sm:$0xff]
    %v490 = vld [vmem:[#allocation2 + $0xd00] sm:$0xff]
    %v491 = vld [vmem:[#allocation2 + $0xd08] sm:$0xff]
    %v492 = vld [vmem:[#allocation2 + $0xd10] sm:$0xff]
    %v493 = vld [vmem:[#allocation2 + $0xd18] sm:$0xff]
    %v494 = vld [vmem:[#allocation2 + $0xd20] sm:$0xff]
    %v495 = vld [vmem:[#allocation2 + $0xd28] sm:$0xff]
    %v496 = vld [vmem:[#allocation2 + $0xd30] sm:$0xff]
    %v497 = vld [vmem:[#allocation2 + $0xd38] sm:$0xff]
    %v498 = vld [vmem:[#allocation2 + $0xd40] sm:$0xff]
    %v499 = vld [vmem:[#allocation2 + $0xd48] sm:$0xff]
    %v500 = vld [vmem:[#allocation2 + $0xd50] sm:$0xff]
    %v501 = vld [vmem:[#allocation2 + $0xd58] sm:$0xff]
    %v502 = vld [vmem:[#allocation2 + $0xd60] sm:$0xff]
    %v503 = vld [vmem:[#allocation2 + $0xd68] sm:$0xff]
    %v504 = vld [vmem:[#allocation2 + $0xd70] sm:$0xff]
    %v505 = vld [vmem:[#allocation2 + $0xd78] sm:$0xff]
    %v506 = vld [vmem:[#allocation2 + $0xd80] sm:$0xff]
    %v507 = vld [vmem:[#allocation2 + $0xd88] sm:$0xff]
    %v508 = vld [vmem:[#allocation2 + $0xd90] sm:$0xff]
    %v509 = vld [vmem:[#allocation2 + $0xd98] sm:$0xff]
    %v510 = vld [vmem:[#allocation2 + $0xda0] sm:$0xff]
    %v511 = vld [vmem:[#allocation2 + $0xda8] sm:$0xff]
    %v512 = vld [vmem:[#allocation2 + $0xdb0] sm:$0xff]
    %v513 = vld [vmem:[#allocation2 + $0xdb8] sm:$0xff]
    %v514 = vld [vmem:[#allocation2 + $0xdc0] sm:$0xff]
    %v515 = vld [vmem:[#allocation2 + $0xdc8] sm:$0xff]
    %v516 = vld [vmem:[#allocation2 + $0xdd0] sm:$0xff]
    %v517 = vld [vmem:[#allocation2 + $0xdd8] sm:$0xff]
    %v518 = vld [vmem:[#allocation2 + $0xde0] sm:$0xff]
    %v519 = vld [vmem:[#allocation2 + $0xde8] sm:$0xff]
    %v520 = vld [vmem:[#allocation2 + $0xdf0] sm:$0xff]
    %v521 = vld [vmem:[#allocation2 + $0xdf8] sm:$0xff]
    %v522 = vld [vmem:[#allocation2 + $0xe00] sm:$0xff]
    %v523 = vld [vmem:[#allocation2 + $0xe08] sm:$0xff]
    %v524 = vld [vmem:[#allocation2 + $0xe10] sm:$0xff]
    %v525 = vld [vmem:[#allocation2 + $0xe18] sm:$0xff]
    %v526 = vld [vmem:[#allocation2 + $0xe20] sm:$0xff]
    %v527 = vld [vmem:[#allocation2 + $0xe28] sm:$0xff]
    %v528 = vld [vmem:[#allocation2 + $0xe30] sm:$0xff]
    %v529 = vld [vmem:[#allocation2 + $0xe38] sm:$0xff]
    %v530 = vld [vmem:[#allocation2 + $0xe40] sm:$0xff]
    %v531 = vld [vmem:[#allocation2 + $0xe48] sm:$0xff]
    %v532 = vld [vmem:[#allocation2 + $0xe50] sm:$0xff]
    %v533 = vld [vmem:[#allocation2 + $0xe58] sm:$0xff]
    %v534 = vld [vmem:[#allocation2 + $0xe60] sm:$0xff]
    %v535 = vld [vmem:[#allocation2 + $0xe68] sm:$0xff]
    %v536 = vld [vmem:[#allocation2 + $0xe70] sm:$0xff]
    %v537 = vld [vmem:[#allocation2 + $0xe78] sm:$0xff]
    %v538 = vld [vmem:[#allocation2 + $0xe80] sm:$0xff]
    %v539 = vld [vmem:[#allocation2 + $0xe88] sm:$0xff]
    %v540 = vld [vmem:[#allocation2 + $0xe90] sm:$0xff]
    %v541 = vld [vmem:[#allocation2 + $0xe98] sm:$0xff]
    %v542 = vld [vmem:[#allocation2 + $0xea0] sm:$0xff]
    %v543 = vld [vmem:[#allocation2 + $0xea8] sm:$0xff]
    %v544 = vld [vmem:[#allocation2 + $0xeb0] sm:$0xff]
    %v545 = vld [vmem:[#allocation2 + $0xeb8] sm:$0xff]
    %v546 = vld [vmem:[#allocation2 + $0xec0] sm:$0xff]
    %v547 = vld [vmem:[#allocation2 + $0xec8] sm:$0xff]
    %v548 = vld [vmem:[#allocation2 + $0xed0] sm:$0xff]
    %v549 = vld [vmem:[#allocation2 + $0xed8] sm:$0xff]
    %v550 = vld [vmem:[#allocation2 + $0xee0] sm:$0xff]
    %v551 = vld [vmem:[#allocation2 + $0xee8] sm:$0xff]
    %v552 = vld [vmem:[#allocation2 + $0xef0] sm:$0xff]
    %v553 = vld [vmem:[#allocation2 + $0xef8] sm:$0xff]
    %v554 = vld [vmem:[#allocation2 + $0xf00] sm:$0xff]
    %v555 = vld [vmem:[#allocation2 + $0xf08] sm:$0xff]
    %v556 = vld [vmem:[#allocation2 + $0xf10] sm:$0xff]
    %v557 = vld [vmem:[#allocation2 + $0xf18] sm:$0xff]
    %v558 = vld [vmem:[#allocation2 + $0xf20] sm:$0xff]
    %v559 = vld [vmem:[#allocation2 + $0xf28] sm:$0xff]
    %v560 = vld [vmem:[#allocation2 + $0xf30] sm:$0xff]
    %v561 = vld [vmem:[#allocation2 + $0xf38] sm:$0xff]
    %v562 = vld [vmem:[#allocation2 + $0xf40] sm:$0xff]
    %v563 = vld [vmem:[#allocation2 + $0xf48] sm:$0xff]
    %v564 = vld [vmem:[#allocation2 + $0xf50] sm:$0xff]
    %v565 = vld [vmem:[#allocation2 + $0xf58] sm:$0xff]
    %v566 = vld [vmem:[#allocation2 + $0xf60] sm:$0xff]
    %v567 = vld [vmem:[#allocation2 + $0xf68] sm:$0xff]
    %v568 = vld [vmem:[#allocation2 + $0xf70] sm:$0xff]
    %v569 = vld [vmem:[#allocation2 + $0xf78] sm:$0xff]
    %v570 = vld [vmem:[#allocation2 + $0xf80] sm:$0xff]
    %v571 = vld [vmem:[#allocation2 + $0xf88] sm:$0xff]
    %v572 = vld [vmem:[#allocation2 + $0xf90] sm:$0xff]
    %v573 = vld [vmem:[#allocation2 + $0xf98] sm:$0xff]
    %v574 = vld [vmem:[#allocation2 + $0xfa0] sm:$0xff]
    %v575 = vld [vmem:[#allocation2 + $0xfa8] sm:$0xff]
    %v576 = vld [vmem:[#allocation2 + $0xfb0] sm:$0xff]
    %v577 = vld [vmem:[#allocation2 + $0xfb8] sm:$0xff]
    %v578 = vld [vmem:[#allocation2 + $0xfc0] sm:$0xff]
    %v579 = vld [vmem:[#allocation2 + $0xfc8] sm:$0xff]
    %v580 = vld [vmem:[#allocation2 + $0xfd0] sm:$0xff]
    %v581 = vld [vmem:[#allocation2 + $0xfd8] sm:$0xff]
    %v582 = vld [vmem:[#allocation2 + $0xfe0] sm:$0xff]
    %v583 = vld [vmem:[#allocation2 + $0xfe8] sm:$0xff]
    %v584 = vld [vmem:[#allocation2 + $0xff0] sm:$0xff]
    %v585 = vld [vmem:[#allocation2 + $0xff8] sm:$0xff]
    %v586 = vld [vmem:[#allocation5] sm:$0xf]
    %v588 = vlaneseq
    %v589 = vshrl.u32 %v588, 7
    %v590 = vsub.s32 0, %v589
    %v591 = vrot.slane %v586, %v590
    %v592 = vlaneseq
    %v593 = vshrl.u32 %v592, 7
    %v594 = vsub.s32 1, %v593
    %v595 = vrot.slane %v586, %v594
    %v596 = vlaneseq
    %v597 = vshrl.u32 %v596, 7
    %v598 = vsub.s32 2, %v597
    %v599 = vrot.slane %v586, %v598
    %v600 = vlaneseq
    %v601 = vshrl.u32 %v600, 7
    %v602 = vsub.s32 3, %v601
    %v603 = vrot.slane %v586, %v602
    %v610 = vcombine.high %v72, %v72
    %v612 = vunpack.c.l.s4 1983009808
    %v613 = vunpack.c.0.s8 %v612
    %v614 = vlaneseq
    %v615 = vshrl.u32 %v614, 7
    %v616 = vsub.s32 %v613, %v615
    %v617 = vrot.slane %v72, %v616
    %v619 = vunpack.c.l.s4 1983009808
    %v620 = vunpack.c.0.s8 %v619
    %v621 = vlaneseq
    %v622 = vshrl.u32 %v621, 7
    %v623 = vsub.s32 %v620, %v622
    %v624 = vrot.slane %v610, %v623
    %v625 = vcombine.high %v617, %v617
    %v626 = vcombine.high %v624, %v624
    %v627 = vcombine.high %v73, %v73
    %v629 = vunpack.c.l.s4 1983009808
    %v630 = vunpack.c.0.s8 %v629
    %v631 = vlaneseq
    %v632 = vshrl.u32 %v631, 7
    %v633 = vsub.s32 %v630, %v632
    %v634 = vrot.slane %v73, %v633
    %v636 = vunpack.c.l.s4 1983009808
    %v637 = vunpack.c.0.s8 %v636
    %v638 = vlaneseq
    %v639 = vshrl.u32 %v638, 7
    %v640 = vsub.s32 %v637, %v639
    %v641 = vrot.slane %v627, %v640
    %v642 = vcombine.high %v634, %v634
    %v643 = vcombine.high %v641, %v641
    %652 = vmatprep.subr.mxu0 %v135
    %653 = vmatpush1.msra.mxu0 %v134
    %654 = vmatprep.subr.mxu0 %v131
    %655 = vmatpush1.msra.mxu0 %v130
    %656 = vmatprep.subr.mxu0 %v127
    %657 = vmatpush1.msra.mxu0 %v126
    %658 = vmatprep.subr.mxu0 %v123
    %659 = vmatpush1.msra.mxu0 %v122
    %660 = vmatprep.subr.mxu0 %v119
    %661 = vmatpush1.msra.mxu0 %v118
    %662 = vmatprep.subr.mxu0 %v115
    %663 = vmatpush1.msra.mxu0 %v114
    %664 = vmatprep.subr.mxu0 %v111
    %665 = vmatpush1.msra.mxu0 %v110
    %666 = vmatprep.subr.mxu0 %v107
    %667 = vmatpush1.msra.mxu0 %v106
    %668 = vmatprep.subr.mxu0 %v103
    %669 = vmatpush1.msra.mxu0 %v102
    %670 = vmatprep.subr.mxu0 %v99
    %671 = vmatpush1.msra.mxu0 %v98
    %672 = vmatprep.subr.mxu0 %v95
    %673 = vmatpush1.msra.mxu0 %v94
    %674 = vmatprep.subr.mxu0 %v91
    %675 = vmatpush1.msra.mxu0 %v90
    %676 = vmatprep.subr.mxu0 %v87
    %677 = vmatpush1.msra.mxu0 %v86
    %678 = vmatprep.subr.mxu0 %v83
    %679 = vmatpush1.msra.mxu0 %v82
    %680 = vmatprep.subr.mxu0 %v79
    %681 = vmatpush1.msra.mxu0 %v78
    %682 = vmatprep.subr.mxu0 %v75
    %683 = vmatpush1.msra.mxu0 %v74
    %684 = vmatprep.subr.mxu0 %v199
    %685 = vmatpush2.msra.mxu0 %v198
    %686 = vmatprep.subr.mxu0 %v195
    %687 = vmatpush2.msra.mxu0 %v194
    %688 = vmatprep.subr.mxu0 %v191
    %689 = vmatpush2.msra.mxu0 %v190
    %690 = vmatprep.subr.mxu0 %v187
    %691 = vmatpush2.msra.mxu0 %v186
    %692 = vmatprep.subr.mxu0 %v183
    %693 = vmatpush2.msra.mxu0 %v182
    %694 = vmatprep.subr.mxu0 %v179
    %695 = vmatpush2.msra.mxu0 %v178
    %696 = vmatprep.subr.mxu0 %v175
    %697 = vmatpush2.msra.mxu0 %v174
    %698 = vmatprep.subr.mxu0 %v171
    %699 = vmatpush2.msra.mxu0 %v170
    %700 = vmatprep.subr.mxu0 %v167
    %701 = vmatpush2.msra.mxu0 %v166
    %702 = vmatprep.subr.mxu0 %v163
    %703 = vmatpush2.msra.mxu0 %v162
    %704 = vmatprep.subr.mxu0 %v159
    %705 = vmatpush2.msra.mxu0 %v158
    %706 = vmatprep.subr.mxu0 %v155
    %707 = vmatpush2.msra.mxu0 %v154
    %708 = vmatprep.subr.mxu0 %v151
    %709 = vmatpush2.msra.mxu0 %v150
    %710 = vmatprep.subr.mxu0 %v147
    %711 = vmatpush2.msra.mxu0 %v146
    %712 = vmatprep.subr.mxu0 %v143
    %713 = vmatpush2.msra.mxu0 %v142
    %714 = vmatprep.subr.mxu0 %v139
    %715 = vmatpush2.msra.mxu0 %v138
    %716 = vmatprep.mubr.f32.mxu0 %v625
    %717 = vmatmul.mubr.f32.gmra.mxu0 %v617
    %v718 = vpop.f32.mrf.mxu0
    %v719 = vadd.f32 %v591, %v718
    %v720 = vpop.f32.mrf.mxu0
    %v721 = vadd.f32 %v595, %v720
    %722 = vdwg.mxu0
    %723 = vmatprep.subr.mxu0 %v263
    %724 = vmatpush1.msra.mxu0 %v262
    %725 = vmatprep.subr.mxu0 %v259
    %726 = vmatpush1.msra.mxu0 %v258
    %727 = vmatprep.subr.mxu0 %v255
    %728 = vmatpush1.msra.mxu0 %v254
    %729 = vmatprep.subr.mxu0 %v251
    %730 = vmatpush1.msra.mxu0 %v250
    %731 = vmatprep.subr.mxu0 %v247
    %732 = vmatpush1.msra.mxu0 %v246
    %733 = vmatprep.subr.mxu0 %v243
    %734 = vmatpush1.msra.mxu0 %v242
    %735 = vmatprep.subr.mxu0 %v239
    %736 = vmatpush1.msra.mxu0 %v238
    %737 = vmatprep.subr.mxu0 %v235
    %738 = vmatpush1.msra.mxu0 %v234
    %739 = vmatprep.subr.mxu0 %v231
    %740 = vmatpush1.msra.mxu0 %v230
    %741 = vmatprep.subr.mxu0 %v227
    %742 = vmatpush1.msra.mxu0 %v226
    %743 = vmatprep.subr.mxu0 %v223
    %744 = vmatpush1.msra.mxu0 %v222
    %745 = vmatprep.subr.mxu0 %v219
    %746 = vmatpush1.msra.mxu0 %v218
    %747 = vmatprep.subr.mxu0 %v215
    %748 = vmatpush1.msra.mxu0 %v214
    %749 = vmatprep.subr.mxu0 %v211
    %750 = vmatpush1.msra.mxu0 %v210
    %751 = vmatprep.subr.mxu0 %v207
    %752 = vmatpush1.msra.mxu0 %v206
    %753 = vmatprep.subr.mxu0 %v203
    %754 = vmatpush1.msra.mxu0 %v202
    %755 = vmatprep.subr.mxu0 %v327
    %756 = vmatpush2.msra.mxu0 %v326
    %757 = vmatprep.subr.mxu0 %v323
    %758 = vmatpush2.msra.mxu0 %v322
    %759 = vmatprep.subr.mxu0 %v319
    %760 = vmatpush2.msra.mxu0 %v318
    %761 = vmatprep.subr.mxu0 %v315
    %762 = vmatpush2.msra.mxu0 %v314
    %763 = vmatprep.subr.mxu0 %v311
    %764 = vmatpush2.msra.mxu0 %v310
    %765 = vmatprep.subr.mxu0 %v307
    %766 = vmatpush2.msra.mxu0 %v306
    %767 = vmatprep.subr.mxu0 %v303
    %768 = vmatpush2.msra.mxu0 %v302
    %769 = vmatprep.subr.mxu0 %v299
    %770 = vmatpush2.msra.mxu0 %v298
    %771 = vmatprep.subr.mxu0 %v295
    %772 = vmatpush2.msra.mxu0 %v294
    %773 = vmatprep.subr.mxu0 %v291
    %774 = vmatpush2.msra.mxu0 %v290
    %775 = vmatprep.subr.mxu0 %v287
    %776 = vmatpush2.msra.mxu0 %v286
    %777 = vmatprep.subr.mxu0 %v283
    %778 = vmatpush2.msra.mxu0 %v282
    %779 = vmatprep.subr.mxu0 %v279
    %780 = vmatpush2.msra.mxu0 %v278
    %781 = vmatprep.subr.mxu0 %v275
    %782 = vmatpush2.msra.mxu0 %v274
    %783 = vmatprep.subr.mxu0 %v271
    %784 = vmatpush2.msra.mxu0 %v270
    %785 = vmatprep.subr.mxu0 %v267
    %786 = vmatpush2.msra.mxu0 %v266
    %787 = vmatprep.mubr.f32.mxu0 %v626
    %788 = vmatmul.mubr.f32.gmra.mxu0 %v624
    %v789 = vpop.f32.mrf.mxu0
    %v790 = vadd.f32 %v719, %v789
    %v791 = vpop.f32.mrf.mxu0
    %v792 = vadd.f32 %v721, %v791
    %793 = vdwg.mxu0
    %794 = vmatprep.subr.mxu0 %v391
    %795 = vmatpush1.msra.mxu0 %v390
    %796 = vmatprep.subr.mxu0 %v387
    %797 = vmatpush1.msra.mxu0 %v386
    %798 = vmatprep.subr.mxu0 %v383
    %799 = vmatpush1.msra.mxu0 %v382
    %800 = vmatprep.subr.mxu0 %v379
    %801 = vmatpush1.msra.mxu0 %v378
    %802 = vmatprep.subr.mxu0 %v375
    %803 = vmatpush1.msra.mxu0 %v374
    %804 = vmatprep.subr.mxu0 %v371
    %805 = vmatpush1.msra.mxu0 %v370
    %806 = vmatprep.subr.mxu0 %v367
    %807 = vmatpush1.msra.mxu0 %v366
    %808 = vmatprep.subr.mxu0 %v363
    %809 = vmatpush1.msra.mxu0 %v362
    %810 = vmatprep.subr.mxu0 %v359
    %811 = vmatpush1.msra.mxu0 %v358
    %812 = vmatprep.subr.mxu0 %v355
    %813 = vmatpush1.msra.mxu0 %v354
    %814 = vmatprep.subr.mxu0 %v351
    %815 = vmatpush1.msra.mxu0 %v350
    %816 = vmatprep.subr.mxu0 %v347
    %817 = vmatpush1.msra.mxu0 %v346
    %818 = vmatprep.subr.mxu0 %v343
    %819 = vmatpush1.msra.mxu0 %v342
    %820 = vmatprep.subr.mxu0 %v339
    %821 = vmatpush1.msra.mxu0 %v338
    %822 = vmatprep.subr.mxu0 %v335
    %823 = vmatpush1.msra.mxu0 %v334
    %824 = vmatprep.subr.mxu0 %v331
    %825 = vmatpush1.msra.mxu0 %v330
    %826 = vmatprep.subr.mxu0 %v455
    %827 = vmatpush2.msra.mxu0 %v454
    %828 = vmatprep.subr.mxu0 %v451
    %829 = vmatpush2.msra.mxu0 %v450
    %830 = vmatprep.subr.mxu0 %v447
    %831 = vmatpush2.msra.mxu0 %v446
    %832 = vmatprep.subr.mxu0 %v443
    %833 = vmatpush2.msra.mxu0 %v442
    %834 = vmatprep.subr.mxu0 %v439
    %835 = vmatpush2.msra.mxu0 %v438
    %836 = vmatprep.subr.mxu0 %v435
    %837 = vmatpush2.msra.mxu0 %v434
    %838 = vmatprep.subr.mxu0 %v431
    %839 = vmatpush2.msra.mxu0 %v430
    %840 = vmatprep.subr.mxu0 %v427
    %841 = vmatpush2.msra.mxu0 %v426
    %842 = vmatprep.subr.mxu0 %v423
    %843 = vmatpush2.msra.mxu0 %v422
    %844 = vmatprep.subr.mxu0 %v419
    %845 = vmatpush2.msra.mxu0 %v418
    %846 = vmatprep.subr.mxu0 %v415
    %847 = vmatpush2.msra.mxu0 %v414
    %848 = vmatprep.subr.mxu0 %v411
    %849 = vmatpush2.msra.mxu0 %v410
    %850 = vmatprep.subr.mxu0 %v407
    %851 = vmatpush2.msra.mxu0 %v406
    %852 = vmatprep.subr.mxu0 %v403
    %853 = vmatpush2.msra.mxu0 %v402
    %854 = vmatprep.subr.mxu0 %v399
    %855 = vmatpush2.msra.mxu0 %v398
    %856 = vmatprep.subr.mxu0 %v395
    %857 = vmatpush2.msra.mxu0 %v394
    %858 = vmatprep.mubr.f32.mxu0 %v642
    %859 = vmatmul.mubr.f32.gmra.mxu0 %v634
    %v860 = vpop.f32.mrf.mxu0
    %v861 = vadd.f32 %v790, %v860
    %v862 = vpop.f32.mrf.mxu0
    %v863 = vadd.f32 %v792, %v862
    %864 = vdwg.mxu0
    %865 = vmatprep.subr.mxu0 %v519
    %866 = vmatpush1.msra.mxu0 %v518
    %867 = vmatprep.subr.mxu0 %v515
    %868 = vmatpush1.msra.mxu0 %v514
    %869 = vmatprep.subr.mxu0 %v511
    %870 = vmatpush1.msra.mxu0 %v510
    %871 = vmatprep.subr.mxu0 %v507
    %872 = vmatpush1.msra.mxu0 %v506
    %873 = vmatprep.subr.mxu0 %v503
    %874 = vmatpush1.msra.mxu0 %v502
    %875 = vmatprep.subr.mxu0 %v499
    %876 = vmatpush1.msra.mxu0 %v498
    %877 = vmatprep.subr.mxu0 %v495
    %878 = vmatpush1.msra.mxu0 %v494
    %879 = vmatprep.subr.mxu0 %v491
    %880 = vmatpush1.msra.mxu0 %v490
    %881 = vmatprep.subr.mxu0 %v487
    %882 = vmatpush1.msra.mxu0 %v486
    %883 = vmatprep.subr.mxu0 %v483
    %884 = vmatpush1.msra.mxu0 %v482
    %885 = vmatprep.subr.mxu0 %v479
    %886 = vmatpush1.msra.mxu0 %v478
    %887 = vmatprep.subr.mxu0 %v475
    %888 = vmatpush1.msra.mxu0 %v474
    %889 = vmatprep.subr.mxu0 %v471
    %890 = vmatpush1.msra.mxu0 %v470
    %891 = vmatprep.subr.mxu0 %v467
    %892 = vmatpush1.msra.mxu0 %v466
    %893 = vmatprep.subr.mxu0 %v463
    %894 = vmatpush1.msra.mxu0 %v462
    %895 = vmatprep.subr.mxu0 %v459
    %896 = vmatpush1.msra.mxu0 %v458
    %897 = vmatprep.subr.mxu0 %v583
    %898 = vmatpush2.msra.mxu0 %v582
    %899 = vmatprep.subr.mxu0 %v579
    %900 = vmatpush2.msra.mxu0 %v578
    %901 = vmatprep.subr.mxu0 %v575
    %902 = vmatpush2.msra.mxu0 %v574
    %903 = vmatprep.subr.mxu0 %v571
    %904 = vmatpush2.msra.mxu0 %v570
    %905 = vmatprep.subr.mxu0 %v567
    %906 = vmatpush2.msra.mxu0 %v566
    %907 = vmatprep.subr.mxu0 %v563
    %908 = vmatpush2.msra.mxu0 %v562
    %909 = vmatprep.subr.mxu0 %v559
    %910 = vmatpush2.msra.mxu0 %v558
    %911 = vmatprep.subr.mxu0 %v555
    %912 = vmatpush2.msra.mxu0 %v554
    %913 = vmatprep.subr.mxu0 %v551
    %914 = vmatpush2.msra.mxu0 %v550
    %915 = vmatprep.subr.mxu0 %v547
    %916 = vmatpush2.msra.mxu0 %v546
    %917 = vmatprep.subr.mxu0 %v543
    %918 = vmatpush2.msra.mxu0 %v542
    %919 = vmatprep.subr.mxu0 %v539
    %920 = vmatpush2.msra.mxu0 %v538
    %921 = vmatprep.subr.mxu0 %v535
    %922 = vmatpush2.msra.mxu0 %v534
    %923 = vmatprep.subr.mxu0 %v531
    %924 = vmatpush2.msra.mxu0 %v530
    %925 = vmatprep.subr.mxu0 %v527
    %926 = vmatpush2.msra.mxu0 %v526
    %927 = vmatprep.subr.mxu0 %v523
    %928 = vmatpush2.msra.mxu0 %v522
    %929 = vmatprep.mubr.f32.mxu0 %v643
    %930 = vmatmul.mubr.f32.gmra.mxu0 %v641
    %v931 = vpop.f32.mrf.mxu0
    %v932 = vadd.f32 %v861, %v931
    %v933 = vpop.f32.mrf.mxu0
    %v934 = vadd.f32 %v863, %v933
    %935 = vdwg.mxu0
    %936 = vmatprep.subr.mxu0 %v137
    %937 = vmatpush1.msra.mxu0 %v136
    %938 = vmatprep.subr.mxu0 %v133
    %939 = vmatpush1.msra.mxu0 %v132
    %940 = vmatprep.subr.mxu0 %v129
    %941 = vmatpush1.msra.mxu0 %v128
    %942 = vmatprep.subr.mxu0 %v125
    %943 = vmatpush1.msra.mxu0 %v124
    %944 = vmatprep.subr.mxu0 %v121
    %945 = vmatpush1.msra.mxu0 %v120
    %946 = vmatprep.subr.mxu0 %v117
    %947 = vmatpush1.msra.mxu0 %v116
    %948 = vmatprep.subr.mxu0 %v113
    %949 = vmatpush1.msra.mxu0 %v112
    %950 = vmatprep.subr.mxu0 %v109
    %951 = vmatpush1.msra.mxu0 %v108
    %952 = vmatprep.subr.mxu0 %v105
    %953 = vmatpush1.msra.mxu0 %v104
    %954 = vmatprep.subr.mxu0 %v101
    %955 = vmatpush1.msra.mxu0 %v100
    %956 = vmatprep.subr.mxu0 %v97
    %957 = vmatpush1.msra.mxu0 %v96
    %958 = vmatprep.subr.mxu0 %v93
    %959 = vmatpush1.msra.mxu0 %v92
    %960 = vmatprep.subr.mxu0 %v89
    %961 = vmatpush1.msra.mxu0 %v88
    %962 = vmatprep.subr.mxu0 %v85
    %963 = vmatpush1.msra.mxu0 %v84
    %964 = vmatprep.subr.mxu0 %v81
    %965 = vmatpush1.msra.mxu0 %v80
    %966 = vmatprep.subr.mxu0 %v77
    %967 = vmatpush1.msra.mxu0 %v76
    %968 = vmatprep.subr.mxu0 %v201
    %969 = vmatpush2.msra.mxu0 %v200
    %970 = vmatprep.subr.mxu0 %v197
    %971 = vmatpush2.msra.mxu0 %v196
    %972 = vmatprep.subr.mxu0 %v193
    %973 = vmatpush2.msra.mxu0 %v192
    %974 = vmatprep.subr.mxu0 %v189
    %975 = vmatpush2.msra.mxu0 %v188
    %976 = vmatprep.subr.mxu0 %v185
    %977 = vmatpush2.msra.mxu0 %v184
    %978 = vmatprep.subr.mxu0 %v181
    %979 = vmatpush2.msra.mxu0 %v180
    %980 = vmatprep.subr.mxu0 %v177
    %981 = vmatpush2.msra.mxu0 %v176
    %982 = vmatprep.subr.mxu0 %v173
    %983 = vmatpush2.msra.mxu0 %v172
    %984 = vmatprep.subr.mxu0 %v169
    %985 = vmatpush2.msra.mxu0 %v168
    %986 = vmatprep.subr.mxu0 %v165
    %987 = vmatpush2.msra.mxu0 %v164
    %988 = vmatprep.subr.mxu0 %v161
    %989 = vmatpush2.msra.mxu0 %v160
    %990 = vmatprep.subr.mxu0 %v157
    %991 = vmatpush2.msra.mxu0 %v156
    %992 = vmatprep.subr.mxu0 %v153
    %993 = vmatpush2.msra.mxu0 %v152
    %994 = vmatprep.subr.mxu0 %v149
    %995 = vmatpush2.msra.mxu0 %v148
    %996 = vmatprep.subr.mxu0 %v145
    %997 = vmatpush2.msra.mxu0 %v144
    %998 = vmatprep.subr.mxu0 %v141
    %999 = vmatpush2.msra.mxu0 %v140
    %1000 = vmatprep.mubr.f32.mxu0 %v625
    %1001 = vmatmul.mubr.f32.gmra.mxu0 %v617
    %v1002 = vpop.f32.mrf.mxu0
    %v1003 = vadd.f32 %v599, %v1002
    %v1004 = vpop.f32.mrf.mxu0
    %v1005 = vadd.f32 %v603, %v1004
    %1006 = vdwg.mxu0
    %1007 = vmatprep.subr.mxu0 %v265
    %1008 = vmatpush1.msra.mxu0 %v264
    %1009 = vmatprep.subr.mxu0 %v261
    %1010 = vmatpush1.msra.mxu0 %v260
    %1011 = vmatprep.subr.mxu0 %v257
    %1012 = vmatpush1.msra.mxu0 %v256
    %1013 = vmatprep.subr.mxu0 %v253
    %1014 = vmatpush1.msra.mxu0 %v252
    %1015 = vmatprep.subr.mxu0 %v249
    %1016 = vmatpush1.msra.mxu0 %v248
    %1017 = vmatprep.subr.mxu0 %v245
    %1018 = vmatpush1.msra.mxu0 %v244
    %1019 = vmatprep.subr.mxu0 %v241
    %1020 = vmatpush1.msra.mxu0 %v240
    %1021 = vmatprep.subr.mxu0 %v237
    %1022 = vmatpush1.msra.mxu0 %v236
    %1023 = vmatprep.subr.mxu0 %v233
    %1024 = vmatpush1.msra.mxu0 %v232
    %1025 = vmatprep.subr.mxu0 %v229
    %1026 = vmatpush1.msra.mxu0 %v228
    %1027 = vmatprep.subr.mxu0 %v225
    %1028 = vmatpush1.msra.mxu0 %v224
    %1029 = vmatprep.subr.mxu0 %v221
    %1030 = vmatpush1.msra.mxu0 %v220
    %1031 = vmatprep.subr.mxu0 %v217
    %1032 = vmatpush1.msra.mxu0 %v216
    %1033 = vmatprep.subr.mxu0 %v213
    %1034 = vmatpush1.msra.mxu0 %v212
    %1035 = vmatprep.subr.mxu0 %v209
    %1036 = vmatpush1.msra.mxu0 %v208
    %1037 = vmatprep.subr.mxu0 %v205
    %1038 = vmatpush1.msra.mxu0 %v204
    %1039 = vmatprep.subr.mxu0 %v329
    %1040 = vmatpush2.msra.mxu0 %v328
    %1041 = vmatprep.subr.mxu0 %v325
    %1042 = vmatpush2.msra.mxu0 %v324
    %1043 = vmatprep.subr.mxu0 %v321
    %1044 = vmatpush2.msra.mxu0 %v320
    %1045 = vmatprep.subr.mxu0 %v317
    %1046 = vmatpush2.msra.mxu0 %v316
    %1047 = vmatprep.subr.mxu0 %v313
    %1048 = vmatpush2.msra.mxu0 %v312
    %1049 = vmatprep.subr.mxu0 %v309
    %1050 = vmatpush2.msra.mxu0 %v308
    %1051 = vmatprep.subr.mxu0 %v305
    %1052 = vmatpush2.msra.mxu0 %v304
    %1053 = vmatprep.subr.mxu0 %v301
    %1054 = vmatpush2.msra.mxu0 %v300
    %1055 = vmatprep.subr.mxu0 %v297
    %1056 = vmatpush2.msra.mxu0 %v296
    %1057 = vmatprep.subr.mxu0 %v293
    %1058 = vmatpush2.msra.mxu0 %v292
    %1059 = vmatprep.subr.mxu0 %v289
    %1060 = vmatpush2.msra.mxu0 %v288
    %1061 = vmatprep.subr.mxu0 %v285
    %1062 = vmatpush2.msra.mxu0 %v284
    %1063 = vmatprep.subr.mxu0 %v281
    %1064 = vmatpush2.msra.mxu0 %v280
    %1065 = vmatprep.subr.mxu0 %v277
    %1066 = vmatpush2.msra.mxu0 %v276
    %1067 = vmatprep.subr.mxu0 %v273
    %1068 = vmatpush2.msra.mxu0 %v272
    %1069 = vmatprep.subr.mxu0 %v269
    %1070 = vmatpush2.msra.mxu0 %v268
    %1071 = vmatprep.mubr.f32.mxu0 %v626
    %1072 = vmatmul.mubr.f32.gmra.mxu0 %v624
    %v1073 = vpop.f32.mrf.mxu0
    %v1074 = vadd.f32 %v1003, %v1073
    %v1075 = vpop.f32.mrf.mxu0
    %v1076 = vadd.f32 %v1005, %v1075
    %1077 = vdwg.mxu0
    %1078 = vmatprep.subr.mxu0 %v393
    %1079 = vmatpush1.msra.mxu0 %v392
    %1080 = vmatprep.subr.mxu0 %v389
    %1081 = vmatpush1.msra.mxu0 %v388
    %1082 = vmatprep.subr.mxu0 %v385
    %1083 = vmatpush1.msra.mxu0 %v384
    %1084 = vmatprep.subr.mxu0 %v381
    %1085 = vmatpush1.msra.mxu0 %v380
    %1086 = vmatprep.subr.mxu0 %v377
    %1087 = vmatpush1.msra.mxu0 %v376
    %1088 = vmatprep.subr.mxu0 %v373
    %1089 = vmatpush1.msra.mxu0 %v372
    %1090 = vmatprep.subr.mxu0 %v369
    %1091 = vmatpush1.msra.mxu0 %v368
    %1092 = vmatprep.subr.mxu0 %v365
    %1093 = vmatpush1.msra.mxu0 %v364
    %1094 = vmatprep.subr.mxu0 %v361
    %1095 = vmatpush1.msra.mxu0 %v360
    %1096 = vmatprep.subr.mxu0 %v357
    %1097 = vmatpush1.msra.mxu0 %v356
    %1098 = vmatprep.subr.mxu0 %v353
    %1099 = vmatpush1.msra.mxu0 %v352
    %1100 = vmatprep.subr.mxu0 %v349
    %1101 = vmatpush1.msra.mxu0 %v348
    %1102 = vmatprep.subr.mxu0 %v345
    %1103 = vmatpush1.msra.mxu0 %v344
    %1104 = vmatprep.subr.mxu0 %v341
    %1105 = vmatpush1.msra.mxu0 %v340
    %1106 = vmatprep.subr.mxu0 %v337
    %1107 = vmatpush1.msra.mxu0 %v336
    %1108 = vmatprep.subr.mxu0 %v333
    %1109 = vmatpush1.msra.mxu0 %v332
    %1110 = vmatprep.subr.mxu0 %v457
    %1111 = vmatpush2.msra.mxu0 %v456
    %1112 = vmatprep.subr.mxu0 %v453
    %1113 = vmatpush2.msra.mxu0 %v452
    %1114 = vmatprep.subr.mxu0 %v449
    %1115 = vmatpush2.msra.mxu0 %v448
    %1116 = vmatprep.subr.mxu0 %v445
    %1117 = vmatpush2.msra.mxu0 %v444
    %1118 = vmatprep.subr.mxu0 %v441
    %1119 = vmatpush2.msra.mxu0 %v440
    %1120 = vmatprep.subr.mxu0 %v437
    %1121 = vmatpush2.msra.mxu0 %v436
    %1122 = vmatprep.subr.mxu0 %v433
    %1123 = vmatpush2.msra.mxu0 %v432
    %1124 = vmatprep.subr.mxu0 %v429
    %1125 = vmatpush2.msra.mxu0 %v428
    %1126 = vmatprep.subr.mxu0 %v425
    %1127 = vmatpush2.msra.mxu0 %v424
    %1128 = vmatprep.subr.mxu0 %v421
    %1129 = vmatpush2.msra.mxu0 %v420
    %1130 = vmatprep.subr.mxu0 %v417
    %1131 = vmatpush2.msra.mxu0 %v416
    %1132 = vmatprep.subr.mxu0 %v413
    %1133 = vmatpush2.msra.mxu0 %v412
    %1134 = vmatprep.subr.mxu0 %v409
    %1135 = vmatpush2.msra.mxu0 %v408
    %1136 = vmatprep.subr.mxu0 %v405
    %1137 = vmatpush2.msra.mxu0 %v404
    %1138 = vmatprep.subr.mxu0 %v401
    %1139 = vmatpush2.msra.mxu0 %v400
    %1140 = vmatprep.subr.mxu0 %v397
    %1141 = vmatpush2.msra.mxu0 %v396
    %1142 = vmatprep.mubr.f32.mxu0 %v642
    %1143 = vmatmul.mubr.f32.gmra.mxu0 %v634
    %v1144 = vpop.f32.mrf.mxu0
    %v1145 = vadd.f32 %v1074, %v1144
    %v1146 = vpop.f32.mrf.mxu0
    %v1147 = vadd.f32 %v1076, %v1146
    %1148 = vdwg.mxu0
    %1149 = vmatprep.subr.mxu0 %v521
    %1150 = vmatpush1.msra.mxu0 %v520
    %1151 = vmatprep.subr.mxu0 %v517
    %1152 = vmatpush1.msra.mxu0 %v516
    %1153 = vmatprep.subr.mxu0 %v513
    %1154 = vmatpush1.msra.mxu0 %v512
    %1155 = vmatprep.subr.mxu0 %v509
    %1156 = vmatpush1.msra.mxu0 %v508
    %1157 = vmatprep.subr.mxu0 %v505
    %1158 = vmatpush1.msra.mxu0 %v504
    %1159 = vmatprep.subr.mxu0 %v501
    %1160 = vmatpush1.msra.mxu0 %v500
    %1161 = vmatprep.subr.mxu0 %v497
    %1162 = vmatpush1.msra.mxu0 %v496
    %1163 = vmatprep.subr.mxu0 %v493
    %1164 = vmatpush1.msra.mxu0 %v492
    %1165 = vmatprep.subr.mxu0 %v489
    %1166 = vmatpush1.msra.mxu0 %v488
    %1167 = vmatprep.subr.mxu0 %v485
    %1168 = vmatpush1.msra.mxu0 %v484
    %1169 = vmatprep.subr.mxu0 %v481
    %1170 = vmatpush1.msra.mxu0 %v480
    %1171 = vmatprep.subr.mxu0 %v477
    %1172 = vmatpush1.msra.mxu0 %v476
    %1173 = vmatprep.subr.mxu0 %v473
    %1174 = vmatpush1.msra.mxu0 %v472
    %1175 = vmatprep.subr.mxu0 %v469
    %1176 = vmatpush1.msra.mxu0 %v468
    %1177 = vmatprep.subr.mxu0 %v465
    %1178 = vmatpush1.msra.mxu0 %v464
    %1179 = vmatprep.subr.mxu0 %v461
    %1180 = vmatpush1.msra.mxu0 %v460
    %1181 = vmatprep.subr.mxu0 %v585
    %1182 = vmatpush2.msra.mxu0 %v584
    %1183 = vmatprep.subr.mxu0 %v581
    %1184 = vmatpush2.msra.mxu0 %v580
    %1185 = vmatprep.subr.mxu0 %v577
    %1186 = vmatpush2.msra.mxu0 %v576
    %1187 = vmatprep.subr.mxu0 %v573
    %1188 = vmatpush2.msra.mxu0 %v572
    %1189 = vmatprep.subr.mxu0 %v569
    %1190 = vmatpush2.msra.mxu0 %v568
    %1191 = vmatprep.subr.mxu0 %v565
    %1192 = vmatpush2.msra.mxu0 %v564
    %1193 = vmatprep.subr.mxu0 %v561
    %1194 = vmatpush2.msra.mxu0 %v560
    %1195 = vmatprep.subr.mxu0 %v557
    %1196 = vmatpush2.msra.mxu0 %v556
    %1197 = vmatprep.subr.mxu0 %v553
    %1198 = vmatpush2.msra.mxu0 %v552
    %1199 = vmatprep.subr.mxu0 %v549
    %1200 = vmatpush2.msra.mxu0 %v548
    %1201 = vmatprep.subr.mxu0 %v545
    %1202 = vmatpush2.msra.mxu0 %v544
    %1203 = vmatprep.subr.mxu0 %v541
    %1204 = vmatpush2.msra.mxu0 %v540
    %1205 = vmatprep.subr.mxu0 %v537
    %1206 = vmatpush2.msra.mxu0 %v536
    %1207 = vmatprep.subr.mxu0 %v533
    %1208 = vmatpush2.msra.mxu0 %v532
    %1209 = vmatprep.subr.mxu0 %v529
    %1210 = vmatpush2.msra.mxu0 %v528
    %1211 = vmatprep.subr.mxu0 %v525
    %1212 = vmatpush2.msra.mxu0 %v524
    %1213 = vmatprep.mubr.f32.mxu0 %v643
    %1214 = vmatmul.mubr.f32.gmra.mxu0 %v641
    %v1215 = vpop.f32.mrf.mxu0
    %v1216 = vadd.f32 %v1145, %v1215
    %v1217 = vpop.f32.mrf.mxu0
    %v1218 = vadd.f32 %v1147, %v1217
    %1219 = vdwg.mxu0
    %v1220 = vmax.f32 %v932, 0.0
    %v1221 = vmax.f32 %v934, 0.0
    %v1222 = vmax.f32 %v1216, 0.0
    %v1223 = vmax.f32 %v1218, 0.0
    %v1224 = vld [vmem:[#allocation7] sm:$0xff]
    %v1225 = vld [vmem:[#allocation7 + $0x8] sm:$0xff]
    %v1226 = vld [vmem:[#allocation7 + $0x10] sm:$0xff]
    %v1227 = vld [vmem:[#allocation7 + $0x18] sm:$0xff]
    %v1228 = vld [vmem:[#allocation7 + $0x20] sm:$0xff]
    %v1229 = vld [vmem:[#allocation7 + $0x28] sm:$0xff]
    %v1230 = vld [vmem:[#allocation7 + $0x30] sm:$0xff]
    %v1231 = vld [vmem:[#allocation7 + $0x38] sm:$0xff]
    %v1232 = vld [vmem:[#allocation7 + $0x40] sm:$0xff]
    %v1233 = vld [vmem:[#allocation7 + $0x48] sm:$0xff]
    %v1234 = vld [vmem:[#allocation7 + $0x50] sm:$0xff]
    %v1235 = vld [vmem:[#allocation7 + $0x58] sm:$0xff]
    %v1236 = vld [vmem:[#allocation7 + $0x60] sm:$0xff]
    %v1237 = vld [vmem:[#allocation7 + $0x68] sm:$0xff]
    %v1238 = vld [vmem:[#allocation7 + $0x70] sm:$0xff]
    %v1239 = vld [vmem:[#allocation7 + $0x78] sm:$0xff]
    %v1240 = vld [vmem:[#allocation7 + $0x80] sm:$0xff]
    %v1241 = vld [vmem:[#allocation7 + $0x88] sm:$0xff]
    %v1242 = vld [vmem:[#allocation7 + $0x90] sm:$0xff]
    %v1243 = vld [vmem:[#allocation7 + $0x98] sm:$0xff]
    %v1244 = vld [vmem:[#allocation7 + $0xa0] sm:$0xff]
    %v1245 = vld [vmem:[#allocation7 + $0xa8] sm:$0xff]
    %v1246 = vld [vmem:[#allocation7 + $0xb0] sm:$0xff]
    %v1247 = vld [vmem:[#allocation7 + $0xb8] sm:$0xff]
    %v1248 = vld [vmem:[#allocation7 + $0xc0] sm:$0xff]
    %v1249 = vld [vmem:[#allocation7 + $0xc8] sm:$0xff]
    %v1250 = vld [vmem:[#allocation7 + $0xd0] sm:$0xff]
    %v1251 = vld [vmem:[#allocation7 + $0xd8] sm:$0xff]
    %v1252 = vld [vmem:[#allocation7 + $0xe0] sm:$0xff]
    %v1253 = vld [vmem:[#allocation7 + $0xe8] sm:$0xff]
    %v1254 = vld [vmem:[#allocation7 + $0xf0] sm:$0xff]
    %v1255 = vld [vmem:[#allocation7 + $0xf8] sm:$0xff]
    %v1256 = vld [vmem:[#allocation7 + $0x100] sm:$0xff]
    %v1257 = vld [vmem:[#allocation7 + $0x108] sm:$0xff]
    %v1258 = vld [vmem:[#allocation7 + $0x110] sm:$0xff]
    %v1259 = vld [vmem:[#allocation7 + $0x118] sm:$0xff]
    %v1260 = vld [vmem:[#allocation7 + $0x120] sm:$0xff]
    %v1261 = vld [vmem:[#allocation7 + $0x128] sm:$0xff]
    %v1262 = vld [vmem:[#allocation7 + $0x130] sm:$0xff]
    %v1263 = vld [vmem:[#allocation7 + $0x138] sm:$0xff]
    %v1264 = vld [vmem:[#allocation7 + $0x140] sm:$0xff]
    %v1265 = vld [vmem:[#allocation7 + $0x148] sm:$0xff]
    %v1266 = vld [vmem:[#allocation7 + $0x150] sm:$0xff]
    %v1267 = vld [vmem:[#allocation7 + $0x158] sm:$0xff]
    %v1268 = vld [vmem:[#allocation7 + $0x160] sm:$0xff]
    %v1269 = vld [vmem:[#allocation7 + $0x168] sm:$0xff]
    %v1270 = vld [vmem:[#allocation7 + $0x170] sm:$0xff]
    %v1271 = vld [vmem:[#allocation7 + $0x178] sm:$0xff]
    %v1272 = vld [vmem:[#allocation7 + $0x180] sm:$0xff]
    %v1273 = vld [vmem:[#allocation7 + $0x188] sm:$0xff]
    %v1274 = vld [vmem:[#allocation7 + $0x190] sm:$0xff]
    %v1275 = vld [vmem:[#allocation7 + $0x198] sm:$0xff]
    %v1276 = vld [vmem:[#allocation7 + $0x1a0] sm:$0xff]
    %v1277 = vld [vmem:[#allocation7 + $0x1a8] sm:$0xff]
    %v1278 = vld [vmem:[#allocation7 + $0x1b0] sm:$0xff]
    %v1279 = vld [vmem:[#allocation7 + $0x1b8] sm:$0xff]
    %v1280 = vld [vmem:[#allocation7 + $0x1c0] sm:$0xff]
    %v1281 = vld [vmem:[#allocation7 + $0x1c8] sm:$0xff]
    %v1282 = vld [vmem:[#allocation7 + $0x1d0] sm:$0xff]
    %v1283 = vld [vmem:[#allocation7 + $0x1d8] sm:$0xff]
    %v1284 = vld [vmem:[#allocation7 + $0x1e0] sm:$0xff]
    %v1285 = vld [vmem:[#allocation7 + $0x1e8] sm:$0xff]
    %v1286 = vld [vmem:[#allocation7 + $0x1f0] sm:$0xff]
    %v1287 = vld [vmem:[#allocation7 + $0x1f8] sm:$0xff]
    %v1288 = vld [vmem:[#allocation8] sm:$0x1]
    %v1290 = vlaneseq
    %v1291 = vshrl.u32 %v1290, 7
    %v1292 = vsub.s32 0, %v1291
    %v1293 = vrot.slane %v1288, %v1292
    %1295 = vmatprep.subr.mxu0 0.0
    %1296 = vmatpush1.msra.mxu0 %v1239
    %1297 = vmatprep.subr.mxu0 0.0
    %1298 = vmatpush1.msra.mxu0 %v1238
    %1299 = vmatprep.subr.mxu0 0.0
    %1300 = vmatpush1.msra.mxu0 %v1237
    %1301 = vmatprep.subr.mxu0 0.0
    %1302 = vmatpush1.msra.mxu0 %v1236
    %1303 = vmatprep.subr.mxu0 0.0
    %1304 = vmatpush1.msra.mxu0 %v1235
    %1305 = vmatprep.subr.mxu0 0.0
    %1306 = vmatpush1.msra.mxu0 %v1234
    %1307 = vmatprep.subr.mxu0 0.0
    %1308 = vmatpush1.msra.mxu0 %v1233
    %1309 = vmatprep.subr.mxu0 0.0
    %1310 = vmatpush1.msra.mxu0 %v1232
    %1311 = vmatprep.subr.mxu0 0.0
    %1312 = vmatpush1.msra.mxu0 %v1231
    %1313 = vmatprep.subr.mxu0 0.0
    %1314 = vmatpush1.msra.mxu0 %v1230
    %1315 = vmatprep.subr.mxu0 0.0
    %1316 = vmatpush1.msra.mxu0 %v1229
    %1317 = vmatprep.subr.mxu0 0.0
    %1318 = vmatpush1.msra.mxu0 %v1228
    %1319 = vmatprep.subr.mxu0 0.0
    %1320 = vmatpush1.msra.mxu0 %v1227
    %1321 = vmatprep.subr.mxu0 0.0
    %1322 = vmatpush1.msra.mxu0 %v1226
    %1323 = vmatprep.subr.mxu0 0.0
    %1324 = vmatpush1.msra.mxu0 %v1225
    %1325 = vmatprep.subr.mxu0 0.0
    %1326 = vmatpush1.msra.mxu0 %v1224
    %1327 = vmatprep.subr.mxu0 0.0
    %1328 = vmatpush2.msra.mxu0 %v1255
    %1329 = vmatprep.subr.mxu0 0.0
    %1330 = vmatpush2.msra.mxu0 %v1254
    %1331 = vmatprep.subr.mxu0 0.0
    %1332 = vmatpush2.msra.mxu0 %v1253
    %1333 = vmatprep.subr.mxu0 0.0
    %1334 = vmatpush2.msra.mxu0 %v1252
    %1335 = vmatprep.subr.mxu0 0.0
    %1336 = vmatpush2.msra.mxu0 %v1251
    %1337 = vmatprep.subr.mxu0 0.0
    %1338 = vmatpush2.msra.mxu0 %v1250
    %1339 = vmatprep.subr.mxu0 0.0
    %1340 = vmatpush2.msra.mxu0 %v1249
    %1341 = vmatprep.subr.mxu0 0.0
    %1342 = vmatpush2.msra.mxu0 %v1248
    %1343 = vmatprep.subr.mxu0 0.0
    %1344 = vmatpush2.msra.mxu0 %v1247
    %1345 = vmatprep.subr.mxu0 0.0
    %1346 = vmatpush2.msra.mxu0 %v1246
    %1347 = vmatprep.subr.mxu0 0.0
    %1348 = vmatpush2.msra.mxu0 %v1245
    %1349 = vmatprep.subr.mxu0 0.0
    %1350 = vmatpush2.msra.mxu0 %v1244
    %1351 = vmatprep.subr.mxu0 0.0
    %1352 = vmatpush2.msra.mxu0 %v1243
    %1353 = vmatprep.subr.mxu0 0.0
    %1354 = vmatpush2.msra.mxu0 %v1242
    %1355 = vmatprep.subr.mxu0 0.0
    %1356 = vmatpush2.msra.mxu0 %v1241
    %1357 = vmatprep.subr.mxu0 0.0
    %1358 = vmatpush2.msra.mxu0 %v1240
    %1359 = vmatprep.mubr.f32.mxu0 %v1221
    %1360 = vmatmul.mubr.f32.gmra.mxu0 %v1220
    %v1361 = vpop.f32.mrf.mxu0
    %v1362 = vadd.f32 %v1293, %v1361
    %v1363 = vpop.f32.mrf.mxu0
    %1364 = vdwg.mxu0
    %1365 = vmatprep.subr.mxu0 0.0
    %1366 = vmatpush1.msra.mxu0 %v1271
    %1367 = vmatprep.subr.mxu0 0.0
    %1368 = vmatpush1.msra.mxu0 %v1270
    %1369 = vmatprep.subr.mxu0 0.0
    %1370 = vmatpush1.msra.mxu0 %v1269
    %1371 = vmatprep.subr.mxu0 0.0
    %1372 = vmatpush1.msra.mxu0 %v1268
    %1373 = vmatprep.subr.mxu0 0.0
    %1374 = vmatpush1.msra.mxu0 %v1267
    %1375 = vmatprep.subr.mxu0 0.0
    %1376 = vmatpush1.msra.mxu0 %v1266
    %1377 = vmatprep.subr.mxu0 0.0
    %1378 = vmatpush1.msra.mxu0 %v1265
    %1379 = vmatprep.subr.mxu0 0.0
    %1380 = vmatpush1.msra.mxu0 %v1264
    %1381 = vmatprep.subr.mxu0 0.0
    %1382 = vmatpush1.msra.mxu0 %v1263
    %1383 = vmatprep.subr.mxu0 0.0
    %1384 = vmatpush1.msra.mxu0 %v1262
    %1385 = vmatprep.subr.mxu0 0.0
    %1386 = vmatpush1.msra.mxu0 %v1261
    %1387 = vmatprep.subr.mxu0 0.0
    %1388 = vmatpush1.msra.mxu0 %v1260
    %1389 = vmatprep.subr.mxu0 0.0
    %1390 = vmatpush1.msra.mxu0 %v1259
    %1391 = vmatprep.subr.mxu0 0.0
    %1392 = vmatpush1.msra.mxu0 %v1258
    %1393 = vmatprep.subr.mxu0 0.0
    %1394 = vmatpush1.msra.mxu0 %v1257
    %1395 = vmatprep.subr.mxu0 0.0
    %1396 = vmatpush1.msra.mxu0 %v1256
    %1397 = vmatprep.subr.mxu0 0.0
    %1398 = vmatpush2.msra.mxu0 %v1287
    %1399 = vmatprep.subr.mxu0 0.0
    %1400 = vmatpush2.msra.mxu0 %v1286
    %1401 = vmatprep.subr.mxu0 0.0
    %1402 = vmatpush2.msra.mxu0 %v1285
    %1403 = vmatprep.subr.mxu0 0.0
    %1404 = vmatpush2.msra.mxu0 %v1284
    %1405 = vmatprep.subr.mxu0 0.0
    %1406 = vmatpush2.msra.mxu0 %v1283
    %1407 = vmatprep.subr.mxu0 0.0
    %1408 = vmatpush2.msra.mxu0 %v1282
    %1409 = vmatprep.subr.mxu0 0.0
    %1410 = vmatpush2.msra.mxu0 %v1281
    %1411 = vmatprep.subr.mxu0 0.0
    %1412 = vmatpush2.msra.mxu0 %v1280
    %1413 = vmatprep.subr.mxu0 0.0
    %1414 = vmatpush2.msra.mxu0 %v1279
    %1415 = vmatprep.subr.mxu0 0.0
    %1416 = vmatpush2.msra.mxu0 %v1278
    %1417 = vmatprep.subr.mxu0 0.0
    %1418 = vmatpush2.msra.mxu0 %v1277
    %1419 = vmatprep.subr.mxu0 0.0
    %1420 = vmatpush2.msra.mxu0 %v1276
    %1421 = vmatprep.subr.mxu0 0.0
    %1422 = vmatpush2.msra.mxu0 %v1275
    %1423 = vmatprep.subr.mxu0 0.0
    %1424 = vmatpush2.msra.mxu0 %v1274
    %1425 = vmatprep.subr.mxu0 0.0
    %1426 = vmatpush2.msra.mxu0 %v1273
    %1427 = vmatprep.subr.mxu0 0.0
    %1428 = vmatpush2.msra.mxu0 %v1272
    %1429 = vmatprep.mubr.f32.mxu0 %v1223
    %1430 = vmatmul.mubr.f32.gmra.mxu0 %v1222
    %v1431 = vpop.f32.mrf.mxu0
    %v1432 = vadd.f32 %v1362, %v1431
    %v1433 = vpop.f32.mrf.mxu0
    %1434 = vdwg.mxu0
    %1435 = vst [vmem:[#allocation10] sm:$0x3] %v1432
    // Predicated region
    $region38: #{shared_mtl_forward.1} parent=1 // pred_check
      _
    $region39: #{shared_mtl_forward.1} parent=1 // pred_check_branch
      %1437 = sbr.rel (0) target = $region41
    $region40: #{shared_mtl_forward.1} parent=1 // pred_region
      %s1439 = ssub.s32 32, 32
      %1440 = vsyncadd [#allocation4], %s1439
      %s1442 = sshll.u32 [#allocation10], 4
      %s1443 = int_to_ptr.vmem [resolvable:$true] %s1442
      %1445 = dma.vmem_to_hbm [thread:$0]  %s1443, 32, %s5, [#allocation4]
    $region41: #{shared_mtl_forward.1} parent=1 // pred_fallthru
      _
    // Predicated region
    $region42: #{shared_mtl_forward.1} parent=1 // pred_check
      _
    $region43: #{shared_mtl_forward.1} parent=1 // pred_check_branch
      %1447 = sbr.rel (0) target = $region45
    $region44: #{shared_mtl_forward.1} parent=1 // pred_region
      %1448 = dma.done [#allocation4], 32
    $region45: #{shared_mtl_forward.1} parent=1 // pred_fallthru
      _
    %1449 = vsyncpa [#allocation3], 1
    %1450 = vsyncpa [#allocation6], 1
    %1451 = vsyncpa [#allocation9], 1
    %1452 = vsyncpa [#allocation4], 1

</llo_original>
